<compile_context>
chip_gen: v7x
topology: tpu7x:2x2x1
jax: 0.10.0
libtpu: 0.0.40
codegen_flags: <defaults>
</compile_context>

<pallas_src>
import functools

import jax
import jax.numpy as jnp
from jax.experimental import pallas as pl
from jax.experimental.pallas import tpu as pltpu


def _round_up(x, m):
    return ((x + m - 1) // m) * m


def _attention_kernel(e_ref, att2_ref, we_ref, be_ref, wf_ref,
                      awe_ref, alpha_ref, *, num_pixels):
    TB, P_pad, E = e_ref.shape

    # encoder_att: one large-M MXU matmul (bf16 x bf16 -> f32 accumulate).
    att1 = jnp.dot(e_ref[...].reshape(TB * P_pad, E), we_ref[...],
                   preferred_element_type=jnp.float32)            # (TB*P_pad, A)
    att1 = att1 + be_ref[...].astype(jnp.float32)
    att1 = att1.reshape(TB, P_pad, -1)

    # decoder_att was precomputed in the wrapper (its bias included).
    att2 = att2_ref[...].astype(jnp.float32)                      # (TB, A)
    z = jnp.maximum(att1 + att2[:, None, :], 0.0)                 # ReLU, f32 VPU

    # full_att: width-1 linear -> VPU multiply + lane reduce (no N=1 matmul).
    # Its bias is dropped: softmax is shift-invariant.
    att = jnp.sum(z * wf_ref[...].astype(jnp.float32), axis=-1)   # (TB, P_pad)

    # Mask padded pixels, then a numerically-stable softmax over the pixel axis.
    if num_pixels < P_pad:
        pix = jax.lax.broadcasted_iota(jnp.int32, (TB, P_pad), 1)
        att = jnp.where(pix < num_pixels, att, -jnp.inf)
    m = jnp.max(att, axis=-1, keepdims=True)
    p = jnp.exp(att - m)
    alpha = p / jnp.sum(p, axis=-1, keepdims=True)                # exact normalization

    # attention-weighted encoding on the MXU (padded pixels have alpha == 0).
    # Batched (TB,1,P_pad) x (TB,P_pad,E) matmul; encoder is read again from the
    # VMEM ref at point of use.
    awe = jnp.einsum("bqp,bpe->bqe",
                     alpha[:, None, :].astype(e_ref.dtype), e_ref[...],
                     preferred_element_type=jnp.float32)[:, 0, :]  # (TB, E) f32

    awe_ref[...] = awe.astype(awe_ref.dtype)
    alpha_ref[...] = alpha.astype(alpha_ref.dtype)


def _select_tiling(B, P_pad, E_pad, A_pad, enc_itemsize, out_itemsize, block_b=None):
    """Generation-aware batch tile + VMEM limit (128 MiB v5e/v6e, 64 MiB v7x)."""
    try:
        vmem_cap = int(pltpu.get_tpu_info().vmem_capacity_bytes)
    except Exception:
        vmem_cap = 64 * 1024 * 1024          # conservative (v7x-sized) fallback
    budget = vmem_cap // 2                   # leave half for compiler-internal scratch

    def working_set(tb):
        enc = 2 * tb * P_pad * E_pad * enc_itemsize          # double-buffered encoder tile
        inter = 2 * tb * P_pad * A_pad * 4                   # att1 / z f32 intermediates
        outs = 2 * tb * (E_pad + P_pad) * out_itemsize       # double-buffered outputs
        wts = 2 * (E_pad * A_pad * enc_itemsize + 2 * A_pad * 4 + tb * A_pad * 4)
        return enc + inter + outs + wts

    if block_b is not None:
        tb = max(8, _round_up(block_b, 8))
    else:
        tb = 8
        for cand in (32, 16, 8):
            if working_set(cand) <= budget:
                tb = cand
                break
    tb = min(tb, _round_up(max(B, 1), 8))
    # Prefer >= 2 grid steps when the batch allows it so v7x's two TensorCores
    # both get work on the "parallel" axis (harmless on single-core v5e/v6e).
    while tb > 8 and pl.cdiv(_round_up(B, 8), tb) < 2:
        tb -= 8
    vmem_limit = int(min(vmem_cap - 8 * 1024 * 1024,
                         max(32 * 1024 * 1024, working_set(tb) + 16 * 1024 * 1024)))
    return tb, vmem_limit


def attention_pallas(encoder_out, decoder_hidden, params, *,
                     block_b=None, mxu_dtype=jnp.bfloat16):
    """encoder_out: (B, P, E), decoder_hidden: (B, D) -> (awe (B, E), alpha (B, P))."""
    B, P, E = encoder_out.shape
    we_t, be, wd_t, bd, wf_t, bf = params    # (E,A), (1,A), (D,A), (1,A), (A,1), (1,1)
    A = we_t.shape[1]
    del bf  # softmax shift-invariance: the full_att bias cannot change alpha or awe
    out_dtype = encoder_out.dtype

    # decoder projection (small) as one XLA matmul outside the kernel.
    att2 = (decoder_hidden.astype(jnp.float32) @ wd_t.astype(jnp.float32)
            + bd.astype(jnp.float32))                              # (B, A)

    # Lane/sublane-dense padding of pixel / feature / attention / batch dims.
    P_pad, E_pad, A_pad = _round_up(P, 128), _round_up(E, 128), _round_up(A, 128)

    mxu_dtype = mxu_dtype or encoder_out.dtype
    TB, vmem_limit = _select_tiling(B, P_pad, E_pad, A_pad,
                                    jnp.dtype(mxu_dtype).itemsize,
                                    jnp.dtype(out_dtype).itemsize, block_b)
    B_pad = _round_up(B, TB)

    # bf16 MXU operands: the pad already copies the encoder once, so the cast
    # fuses into it.  All non-MXU math in the kernel stays f32.
    enc = jnp.pad(encoder_out.astype(mxu_dtype),
                  ((0, B_pad - B), (0, P_pad - P), (0, E_pad - E)))
    we_p = jnp.pad(we_t.astype(mxu_dtype), ((0, E_pad - E), (0, A_pad - A)))
    be_p = jnp.pad(be.astype(jnp.float32), ((0, 0), (0, A_pad - A)))
    wf_p = jnp.pad(wf_t.astype(jnp.float32).T, ((0, 0), (0, A_pad - A)))  # (1, A_pad)
    att2_p = jnp.pad(att2, ((0, B_pad - B), (0, A_pad - A)))

    kernel = functools.partial(_attention_kernel, num_pixels=P)

    # Note: the constant-index weight specs (we_p/be_p/wf_p) could use
    # pipeline_mode=pl.Buffered(1) to save one weight copy of VMEM on v7x; left
    # at the default for lowering robustness.
    # TODO(synk): for very large P*A, chunk the pixel axis in two fori_loop
    # passes to bound the f32 (TB, chunk, A) intermediates.
    awe, alpha = pl.pallas_call(
        kernel,
        out_shape=(jax.ShapeDtypeStruct((B_pad, E_pad), out_dtype),
                   jax.ShapeDtypeStruct((B_pad, P_pad), out_dtype)),
        grid_spec=pltpu.PrefetchScalarGridSpec(
            num_scalar_prefetch=0,
            grid=(B_pad // TB,),
            in_specs=[
                pl.BlockSpec((TB, P_pad, E_pad), lambda b: (b, 0, 0)),  # encoder tile
                pl.BlockSpec((TB, A_pad), lambda b: (b, 0)),            # precomputed att2
                pl.BlockSpec((E_pad, A_pad), lambda b: (0, 0)),         # W_enc^T (resident)
                pl.BlockSpec((1, A_pad), lambda b: (0, 0)),             # b_enc
                pl.BlockSpec((1, A_pad), lambda b: (0, 0)),             # w_full row
            ],
            out_specs=(
                pl.BlockSpec((TB, E_pad), lambda b: (b, 0)),            # awe
                pl.BlockSpec((TB, P_pad), lambda b: (b, 0)),            # alpha (lane-dense)
            ),
        ),
        compiler_params=pltpu.CompilerParams(
            dimension_semantics=("parallel",),
            vmem_limit_bytes=vmem_limit,
        ),
    )(enc, att2_p, we_p, be_p, wf_p)

    return awe[:B, :E], alpha[:B, :P]


def attention_ref(encoder_out, decoder_hidden, params):
    """Pure-JAX f32 reference matching the PyTorch forward exactly (keeps bf)."""
    we_t, be, wd_t, bd, wf_t, bf = params
    att1 = encoder_out @ we_t + be[0]                              # (B, P, A)
    att2 = decoder_hidden @ wd_t + bd[0]                           # (B, A)
    att = (jnp.maximum(att1 + att2[:, None, :], 0.0) @ wf_t)[..., 0] + bf[0, 0]
    alpha = jax.nn.softmax(att, axis=1)
    awe = jnp.sum(encoder_out * alpha[:, :, None], axis=1)
    return awe, alpha


def init_params(key, encoder_dim, decoder_dim, attention_dim, dtype=jnp.float32):
    k = jax.random.split(key, 6)
    # nn.Linear weight shape is (out, in); we store pre-transposed (in, out).
    we_t = jax.random.normal(k[0], (encoder_dim, attention_dim), dtype) * 0.1
    be = jax.random.normal(k[1], (1, attention_dim), dtype) * 0.1
    wd_t = jax.random.normal(k[2], (decoder_dim, attention_dim), dtype) * 0.1
    bd = jax.random.normal(k[3], (1, attention_dim), dtype) * 0.1
    wf_t = jax.random.normal(k[4], (attention_dim, 1), dtype) * 0.1
    bf = jax.random.normal(k[5], (1, 1), dtype) * 0.1
    return we_t, be, wd_t, bd, wf_t, bf


if __name__ == "__main__":
    B, P = 2, 16                 # batch, num_pixels
    encoder_dim, decoder_dim, attention_dim = 32, 32, 32

    key = jax.random.PRNGKey(0)
    k_enc, k_dec, k_par = jax.random.split(key, 3)
    encoder_out = jax.random.normal(k_enc, (B, P, encoder_dim), jnp.float32)
    decoder_hidden = jax.random.normal(k_dec, (B, decoder_dim), jnp.float32)
    params = init_params(k_par, encoder_dim, decoder_dim, attention_dim)

    awe, alpha = attention_pallas(encoder_out, decoder_hidden, params)
    awe = jax.block_until_ready(awe)
    alpha = jax.block_until_ready(alpha)

    awe_ref, alpha_ref = attention_ref(encoder_out, decoder_hidden, params)
    # Tolerances account for the bf16 MXU operands (accumulation and all other
    # math are f32; softmax normalization is an exact divide).
    assert jnp.allclose(awe, awe_ref, atol=1e-2, rtol=2e-2), "awe mismatch"
    assert jnp.allclose(alpha, alpha_ref, atol=3e-3, rtol=2e-2), "alpha mismatch"
    assert jnp.allclose(jnp.sum(alpha, axis=1), 1.0, atol=1e-5), "alpha rows must sum to 1"

    print("KERNEL_OK")
</pallas_src>

<mosaic_0001>
module attributes {stable_mosaic.version = 11 : i64} {
  func.func @_attention_kernel(%arg0: i32, %arg1: memref<8x128x128xbf16, #tpu.memory_space<vmem>>, %arg2: memref<8x128xf32, #tpu.memory_space<vmem>>, %arg3: memref<128x128xbf16, #tpu.memory_space<vmem>>, %arg4: memref<1x128xf32, #tpu.memory_space<vmem>>, %arg5: memref<1x128xf32, #tpu.memory_space<vmem>>, %arg6: memref<8x128xf32, #tpu.memory_space<vmem>>, %arg7: memref<8x128xf32, #tpu.memory_space<vmem>>) attributes {dimension_semantics = [#tpu.dimension_semantics<parallel>], iteration_bounds = array<i64: 1>, scalar_prefetch = 0 : i64, scratch_operands = 0 : i64, tpu.core_type = #tpu.core_type<tc>, window_params = [{transform_indices = @transform_0, window_bounds = array<i64: 8, 128, 128>}, {transform_indices = @transform_1, window_bounds = array<i64: 8, 128>}, {pipeline_mode = #tpu.pipeline_mode<synchronous>, transform_indices = @transform_2, window_bounds = array<i64: 128, 128>}, {pipeline_mode = #tpu.pipeline_mode<synchronous>, transform_indices = @transform_3, window_bounds = array<i64: 1, 128>}, {pipeline_mode = #tpu.pipeline_mode<synchronous>, transform_indices = @transform_4, window_bounds = array<i64: 1, 128>}, {transform_indices = @transform_5, window_bounds = array<i64: 8, 128>}, {transform_indices = @transform_6, window_bounds = array<i64: 8, 128>}]} {
    %c0 = arith.constant 0 : index
    %c0_0 = arith.constant 0 : index
    %c0_1 = arith.constant 0 : index
    %0 = vector.load %arg1[%c0, %c0_0, %c0_1] : memref<8x128x128xbf16, #tpu.memory_space<vmem>>, vector<8x128x128xbf16>
    %1 = vector.shape_cast %0 : vector<8x128x128xbf16> to vector<1024x128xbf16>
    %c0_2 = arith.constant 0 : index
    %c0_3 = arith.constant 0 : index
    %2 = vector.load %arg3[%c0_2, %c0_3] : memref<128x128xbf16, #tpu.memory_space<vmem>>, vector<128x128xbf16>
    %cst = arith.constant dense<0.000000e+00> : vector<1024x128xf32>
    %3 = tpu.matmul %1, %2, %cst {dimension_numbers = #tpu.dot_dimension_numbers<[1], [0], [0], [1], [0, 0, 1, 1], [], []>} : vector<1024x128xbf16>, vector<128x128xbf16>, vector<1024x128xf32> -> vector<1024x128xf32>
    %c0_4 = arith.constant 0 : index
    %c0_5 = arith.constant 0 : index
    %4 = vector.load %arg4[%c0_4, %c0_5] : memref<1x128xf32, #tpu.memory_space<vmem>>, vector<1x128xf32>
    %5 = vector.broadcast %4 : vector<1x128xf32> to vector<1024x128xf32>
    %6 = arith.addf %3, %5 : vector<1024x128xf32>
    %7 = vector.shape_cast %6 : vector<1024x128xf32> to vector<8x128x128xf32>
    %c0_6 = arith.constant 0 : index
    %c0_7 = arith.constant 0 : index
    %8 = vector.load %arg2[%c0_6, %c0_7] : memref<8x128xf32, #tpu.memory_space<vmem>>, vector<8x128xf32>
    %9 = vector.shape_cast %8 : vector<8x128xf32> to vector<8x1x128xf32>
    %10 = vector.broadcast %9 : vector<8x1x128xf32> to vector<8x128x128xf32>
    %11 = arith.addf %7, %10 : vector<8x128x128xf32>
    %cst_8 = arith.constant 0.000000e+00 : f32
    %12 = vector.broadcast %cst_8 : f32 to vector<8x128x128xf32>
    %13 = arith.maximumf %11, %12 : vector<8x128x128xf32>
    %c0_9 = arith.constant 0 : index
    %c0_10 = arith.constant 0 : index
    %14 = vector.load %arg5[%c0_9, %c0_10] : memref<1x128xf32, #tpu.memory_space<vmem>>, vector<1x128xf32>
    %15 = vector.shape_cast %14 : vector<1x128xf32> to vector<1x1x128xf32>
    %16 = vector.broadcast %15 : vector<1x1x128xf32> to vector<8x128x128xf32>
    %17 = arith.mulf %13, %16 : vector<8x128x128xf32>
    %cst_11 = arith.constant dense<0.000000e+00> : vector<8x128xf32>
    %18 = vector.multi_reduction <add>, %17, %cst_11 [2] : vector<8x128x128xf32> to vector<8x128xf32>
    %19 = tpu.iota {dimensions = array<i32: 1>} : vector<8x128xi32>
    %c16_i32 = arith.constant 16 : i32
    %20 = vector.broadcast %c16_i32 : i32 to vector<8x128xi32>
    %21 = arith.cmpi slt, %19, %20 : vector<8x128xi32>
    %cst_12 = arith.constant 0xFF800000 : f32
    %22 = vector.broadcast %cst_12 : f32 to vector<8x128xf32>
    %23 = arith.select %21, %18, %22 : vector<8x128xi1>, vector<8x128xf32>
    %cst_13 = arith.constant dense<0xFF800000> : vector<8xf32>
    %24 = vector.multi_reduction <maximumf>, %23, %cst_13 [1] : vector<8x128xf32> to vector<8xf32>
    %25 = vector.shape_cast %24 : vector<8xf32> to vector<8x1xf32>
    %26 = vector.broadcast %25 : vector<8x1xf32> to vector<8x128xf32>
    %27 = arith.subf %23, %26 : vector<8x128xf32>
    %28 = math.exp %27 : vector<8x128xf32>
    %cst_14 = arith.constant dense<0.000000e+00> : vector<8xf32>
    %29 = vector.multi_reduction <add>, %28, %cst_14 [1] : vector<8x128xf32> to vector<8xf32>
    %30 = vector.shape_cast %29 : vector<8xf32> to vector<8x1xf32>
    %31 = vector.broadcast %30 : vector<8x1xf32> to vector<8x128xf32>
    %32 = arith.divf %28, %31 : vector<8x128xf32>
    %33 = vector.shape_cast %32 : vector<8x128xf32> to vector<8x1x128xf32>
    %34 = arith.truncf %33 : vector<8x1x128xf32> to vector<8x1x128xbf16>
    %c0_15 = arith.constant 0 : index
    %c0_16 = arith.constant 0 : index
    %c0_17 = arith.constant 0 : index
    %35 = vector.load %arg1[%c0_15, %c0_16, %c0_17] : memref<8x128x128xbf16, #tpu.memory_space<vmem>>, vector<8x128x128xbf16>
    "tpu.trace_start"() <{level = 10 : i32, message = "bqp,bpe->bqe"}> : () -> ()
    %cst_18 = arith.constant dense<0.000000e+00> : vector<8x1x128xf32>
    %36 = tpu.matmul %34, %35, %cst_18 {dimension_numbers = #tpu.dot_dimension_numbers<[2], [1], [1], [2], [0, 0, 0, 1, 1, 2], [0], [0]>} : vector<8x1x128xbf16>, vector<8x128x128xbf16>, vector<8x1x128xf32> -> vector<8x1x128xf32>
    "tpu.trace_stop"() : () -> ()
    %37 = vector.shape_cast %36 : vector<8x1x128xf32> to vector<8x128xf32>
    %c0_19 = arith.constant 0 : index
    %c0_20 = arith.constant 0 : index
    %38 = vector.load %arg6[%c0_19, %c0_20] : memref<8x128xf32, #tpu.memory_space<vmem>>, vector<8x128xf32>
    tpu.vector_store %arg6[%c0_19, %c0_20], %37 {strides = array<i32>} : memref<8x128xf32, #tpu.memory_space<vmem>>, vector<8x128xf32>,
    %c0_21 = arith.constant 0 : index
    %c0_22 = arith.constant 0 : index
    %39 = vector.load %arg7[%c0_21, %c0_22] : memref<8x128xf32, #tpu.memory_space<vmem>>, vector<8x128xf32>
    tpu.vector_store %arg7[%c0_21, %c0_22], %32 {strides = array<i32>} : memref<8x128xf32, #tpu.memory_space<vmem>>, vector<8x128xf32>,
    return
  }
  func.func @transform_0(%arg0: i32) -> (i32, i32, i32) {
    %c0_i32 = arith.constant 0 : i32
    %c0_i32_0 = arith.constant 0 : i32
    %c0_i32_1 = arith.constant 0 : i32
    return %arg0, %c0_i32, %c0_i32_0 : i32, i32, i32
  }
  func.func @transform_1(%arg0: i32) -> (i32, i32) {
    %c0_i32 = arith.constant 0 : i32
    %c0_i32_0 = arith.constant 0 : i32
    return %arg0, %c0_i32 : i32, i32
  }
  func.func @transform_2(%arg0: i32) -> (i32, i32) {
    %c0_i32 = arith.constant 0 : i32
    %c0_i32_0 = arith.constant 0 : i32
    %c0_i32_1 = arith.constant 0 : i32
    return %c0_i32, %c0_i32_0 : i32, i32
  }
  func.func @transform_3(%arg0: i32) -> (i32, i32) {
    %c0_i32 = arith.constant 0 : i32
    %c0_i32_0 = arith.constant 0 : i32
    %c0_i32_1 = arith.constant 0 : i32
    return %c0_i32, %c0_i32_0 : i32, i32
  }
  func.func @transform_4(%arg0: i32) -> (i32, i32) {
    %c0_i32 = arith.constant 0 : i32
    %c0_i32_0 = arith.constant 0 : i32
    %c0_i32_1 = arith.constant 0 : i32
    return %c0_i32, %c0_i32_0 : i32, i32
  }
  func.func @transform_5(%arg0: i32) -> (i32, i32) {
    %c0_i32 = arith.constant 0 : i32
    %c0_i32_0 = arith.constant 0 : i32
    return %arg0, %c0_i32 : i32, i32
  }
  func.func @transform_6(%arg0: i32) -> (i32, i32) {
    %c0_i32 = arith.constant 0 : i32
    %c0_i32_0 = arith.constant 0 : i32
    return %arg0, %c0_i32 : i32, i32
  }
}

</mosaic_0001>

<llo_original>
// kernel: tpu_custom_call.1
$region0: #{tpu_custom_call.1}
  #allocation0 [shape = 'u32[]', space=smem, size = 0x4, offset = 0x4, fixed_abs, tag = 'smem constant byte address 0x4 - core index']
  #allocation1 [shape = 'u32[144,128]{1,0:T(1,128)}', space=vmem, size = 0x12000, scoped, tag = 'internal scratch']
  %s0 = inlined_call_operand.hbm [shape: bf16[8,128,128], index: 0, kind: input, shape index: {}]
  %s1 = inlined_call_operand.hbm [shape: f32[8,128], index: 1, kind: input, shape index: {}]
  %s2 = inlined_call_operand.hbm [shape: bf16[128,128], index: 2, kind: input, shape index: {}]
  %s3 = inlined_call_operand.vmem [shape: f32[1,128], index: 3, kind: input, shape index: {}]
  %s4 = inlined_call_operand.vmem [shape: f32[1,128], index: 4, kind: input, shape index: {}]
  %s5 = inlined_call_operand.hbm [shape: f32[8,128], index: 5, kind: output, shape index: {0}]
  %s6 = inlined_call_operand.hbm [shape: f32[8,128], index: 6, kind: output, shape index: {1}]
  %7 = xla_tuple %s5, %s6
  %s8 = sld [smem:[#allocation0]]
  $region50: #{tpu_custom_call.1} parent=0
    _
  %s10 = ssub.s32 1, %s8
  %s11 = scalar_select 0, %s10, %s8
  $region1: #{tpu_custom_call.1} parent=0
    #allocation2 [shape = 'u8[262144]{0}', space=vmem, size = 0x40000, scoped, tag = 'input window, operand 0, single buffered']
    #allocation3 [shape = 's32[1]{0}', space=sflag, size = 0x4, scoped, tag = 'scoped memory for tpu_custom_call.1']
    #allocation4 [shape = 's32[1]{0}', space=sflag, size = 0x4, scoped, tag = 'scoped memory for tpu_custom_call.1']
    #allocation5 [shape = 'u8[4096]{0}', space=vmem, size = 0x1000, scoped, tag = 'input window, operand 1, single buffered']
    #allocation6 [shape = 's32[1]{0}', space=sflag, size = 0x4, scoped, tag = 'scoped memory for tpu_custom_call.1']
    #allocation7 [shape = 'u8[32768]{0}', space=vmem, size = 0x8000, scoped, tag = 'input window, operand 2, single buffered']
    #allocation8 [shape = 'u8[4096]{0}', space=vmem, size = 0x1000, scoped, tag = 'output window, operand 0, single buffered']
    #allocation9 [shape = 'u8[4096]{0}', space=vmem, size = 0x1000, scoped, tag = 'output window, operand 1, single buffered']
    #allocation10 [shape = 's32[1]{0}', space=sflag, size = 0x4, scoped, tag = 'scoped memory for tpu_custom_call.1']
    %12 = vsyncpa [#allocation3], 0
    %13 = vsyncpa [#allocation6], 0
    %14 = vsyncpa [#allocation4], 0
    %15 = vsyncpa [#allocation10], 0
    // Predicated region
    $region2: #{tpu_custom_call.1} parent=1 // pred_check
      _
    $region3: #{tpu_custom_call.1} parent=1 // pred_check_branch
      %17 = sbr.rel (0) target = $region5
    $region4: #{tpu_custom_call.1} parent=1 // pred_region
      %s19 = ssub.s32 8192, 8192
      %20 = vsyncadd [#allocation3], %s19
      %s21 = sshll.u32 [#allocation2], 4
      %s22 = int_to_ptr.vmem [resolvable:$true] %s21
      %27 = dma.hbm_to_vmem [thread:$0]  %s0, 8192, %s22, [#allocation3], 64, 64, 4
    $region5: #{tpu_custom_call.1} parent=1 // pred_fallthru
      _
    // Predicated region
    $region6: #{tpu_custom_call.1} parent=1 // pred_check
      _
    $region7: #{tpu_custom_call.1} parent=1 // pred_check_branch
      %29 = sbr.rel (0) target = $region9
    $region8: #{tpu_custom_call.1} parent=1 // pred_region
      %s31 = ssub.s32 128, 128
      %32 = vsyncadd [#allocation6], %s31
      %s34 = sshll.u32 [#allocation5], 4
      %s35 = int_to_ptr.vmem [resolvable:$true] %s34
      %37 = dma.hbm_to_vmem [thread:$0]  %s1, 128, %s35, [#allocation6]
    $region9: #{tpu_custom_call.1} parent=1 // pred_fallthru
      _
    // Predicated region
    $region10: #{tpu_custom_call.1} parent=1 // pred_check
      _
    $region11: #{tpu_custom_call.1} parent=1 // pred_check_branch
      %39 = sbr.rel (0) target = $region13
    $region12: #{tpu_custom_call.1} parent=1 // pred_region
      %s41 = ssub.s32 1024, 1024
      %42 = vsyncadd [#allocation6], %s41
      %s43 = sshll.u32 [#allocation7], 4
      %s44 = int_to_ptr.vmem [resolvable:$true] %s43
      %49 = dma.hbm_to_vmem [thread:$0]  %s2, 1024, %s44, [#allocation6], 64, 64, 4
    $region13: #{tpu_custom_call.1} parent=1 // pred_fallthru
      _
    // Predicated region
    $region14: #{tpu_custom_call.1} parent=1 // pred_check
      _
    $region15: #{tpu_custom_call.1} parent=1 // pred_check_branch
      %51 = sbr.rel (0) target = $region17
    $region16: #{tpu_custom_call.1} parent=1 // pred_region
      _
    $region17: #{tpu_custom_call.1} parent=1 // pred_fallthru
      _
    // Predicated region
    $region18: #{tpu_custom_call.1} parent=1 // pred_check
      _
    $region19: #{tpu_custom_call.1} parent=1 // pred_check_branch
      %53 = sbr.rel (0) target = $region21
    $region20: #{tpu_custom_call.1} parent=1 // pred_region
      _
    $region21: #{tpu_custom_call.1} parent=1 // pred_fallthru
      _
    // Predicated region
    $region22: #{tpu_custom_call.1} parent=1 // pred_check
      _
    $region23: #{tpu_custom_call.1} parent=1 // pred_check_branch
      %55 = sbr.rel (0) target = $region25
    $region24: #{tpu_custom_call.1} parent=1 // pred_region
      %56 = dma.done [#allocation3], 8192
    $region25: #{tpu_custom_call.1} parent=1 // pred_fallthru
      _
    // Predicated region
    $region26: #{tpu_custom_call.1} parent=1 // pred_check
      _
    $region27: #{tpu_custom_call.1} parent=1 // pred_check_branch
      %58 = sbr.rel (0) target = $region29
    $region28: #{tpu_custom_call.1} parent=1 // pred_region
      %59 = dma.done [#allocation6], 128
    $region29: #{tpu_custom_call.1} parent=1 // pred_fallthru
      _
    // Predicated region
    $region30: #{tpu_custom_call.1} parent=1 // pred_check
      _
    $region31: #{tpu_custom_call.1} parent=1 // pred_check_branch
      %61 = sbr.rel (0) target = $region33
    $region32: #{tpu_custom_call.1} parent=1 // pred_region
      %62 = dma.done [#allocation6], 1024
    $region33: #{tpu_custom_call.1} parent=1 // pred_fallthru
      _
    %v64 = vld [vmem:[#allocation2] sm:$0xf]
    %v65 = vld [vmem:[#allocation2 + $0x4] sm:$0xf]
    %v66 = vld [vmem:[#allocation2 + $0x8] sm:$0xf]
    %v67 = vld [vmem:[#allocation2 + $0xc] sm:$0xf]
    %v68 = vld [vmem:[#allocation2 + $0x10] sm:$0xf]
    %v69 = vld [vmem:[#allocation2 + $0x14] sm:$0xf]
    %v70 = vld [vmem:[#allocation2 + $0x18] sm:$0xf]
    %v71 = vld [vmem:[#allocation2 + $0x1c] sm:$0xf]
    %v72 = vld [vmem:[#allocation2 + $0x20] sm:$0xf]
    %v73 = vld [vmem:[#allocation2 + $0x24] sm:$0xf]
    %v74 = vld [vmem:[#allocation2 + $0x28] sm:$0xf]
    %v75 = vld [vmem:[#allocation2 + $0x2c] sm:$0xf]
    %v76 = vld [vmem:[#allocation2 + $0x30] sm:$0xf]
    %v77 = vld [vmem:[#allocation2 + $0x34] sm:$0xf]
    %v78 = vld [vmem:[#allocation2 + $0x38] sm:$0xf]
    %v79 = vld [vmem:[#allocation2 + $0x3c] sm:$0xf]
    %v80 = vld [vmem:[#allocation2 + $0x40] sm:$0xf]
    %v81 = vld [vmem:[#allocation2 + $0x44] sm:$0xf]
    %v82 = vld [vmem:[#allocation2 + $0x48] sm:$0xf]
    %v83 = vld [vmem:[#allocation2 + $0x4c] sm:$0xf]
    %v84 = vld [vmem:[#allocation2 + $0x50] sm:$0xf]
    %v85 = vld [vmem:[#allocation2 + $0x54] sm:$0xf]
    %v86 = vld [vmem:[#allocation2 + $0x58] sm:$0xf]
    %v87 = vld [vmem:[#allocation2 + $0x5c] sm:$0xf]
    %v88 = vld [vmem:[#allocation2 + $0x60] sm:$0xf]
    %v89 = vld [vmem:[#allocation2 + $0x64] sm:$0xf]
    %v90 = vld [vmem:[#allocation2 + $0x68] sm:$0xf]
    %v91 = vld [vmem:[#allocation2 + $0x6c] sm:$0xf]
    %v92 = vld [vmem:[#allocation2 + $0x70] sm:$0xf]
    %v93 = vld [vmem:[#allocation2 + $0x74] sm:$0xf]
    %v94 = vld [vmem:[#allocation2 + $0x78] sm:$0xf]
    %v95 = vld [vmem:[#allocation2 + $0x7c] sm:$0xf]
    %v96 = vld [vmem:[#allocation2 + $0x80] sm:$0xf]
    %v97 = vld [vmem:[#allocation2 + $0x84] sm:$0xf]
    %v98 = vld [vmem:[#allocation2 + $0x88] sm:$0xf]
    %v99 = vld [vmem:[#allocation2 + $0x8c] sm:$0xf]
    %v100 = vld [vmem:[#allocation2 + $0x90] sm:$0xf]
    %v101 = vld [vmem:[#allocation2 + $0x94] sm:$0xf]
    %v102 = vld [vmem:[#allocation2 + $0x98] sm:$0xf]
    %v103 = vld [vmem:[#allocation2 + $0x9c] sm:$0xf]
    %v104 = vld [vmem:[#allocation2 + $0xa0] sm:$0xf]
    %v105 = vld [vmem:[#allocation2 + $0xa4] sm:$0xf]
    %v106 = vld [vmem:[#allocation2 + $0xa8] sm:$0xf]
    %v107 = vld [vmem:[#allocation2 + $0xac] sm:$0xf]
    %v108 = vld [vmem:[#allocation2 + $0xb0] sm:$0xf]
    %v109 = vld [vmem:[#allocation2 + $0xb4] sm:$0xf]
    %v110 = vld [vmem:[#allocation2 + $0xb8] sm:$0xf]
    %v111 = vld [vmem:[#allocation2 + $0xbc] sm:$0xf]
    %v112 = vld [vmem:[#allocation2 + $0xc0] sm:$0xf]
    %v113 = vld [vmem:[#allocation2 + $0xc4] sm:$0xf]
    %v114 = vld [vmem:[#allocation2 + $0xc8] sm:$0xf]
    %v115 = vld [vmem:[#allocation2 + $0xcc] sm:$0xf]
    %v116 = vld [vmem:[#allocation2 + $0xd0] sm:$0xf]
    %v117 = vld [vmem:[#allocation2 + $0xd4] sm:$0xf]
    %v118 = vld [vmem:[#allocation2 + $0xd8] sm:$0xf]
    %v119 = vld [vmem:[#allocation2 + $0xdc] sm:$0xf]
    %v120 = vld [vmem:[#allocation2 + $0xe0] sm:$0xf]
    %v121 = vld [vmem:[#allocation2 + $0xe4] sm:$0xf]
    %v122 = vld [vmem:[#allocation2 + $0xe8] sm:$0xf]
    %v123 = vld [vmem:[#allocation2 + $0xec] sm:$0xf]
    %v124 = vld [vmem:[#allocation2 + $0xf0] sm:$0xf]
    %v125 = vld [vmem:[#allocation2 + $0xf4] sm:$0xf]
    %v126 = vld [vmem:[#allocation2 + $0xf8] sm:$0xf]
    %v127 = vld [vmem:[#allocation2 + $0xfc] sm:$0xf]
    %v128 = vld [vmem:[#allocation2 + $0x100] sm:$0xf]
    %v129 = vld [vmem:[#allocation2 + $0x104] sm:$0xf]
    %v130 = vld [vmem:[#allocation2 + $0x108] sm:$0xf]
    %v131 = vld [vmem:[#allocation2 + $0x10c] sm:$0xf]
    %v132 = vld [vmem:[#allocation2 + $0x110] sm:$0xf]
    %v133 = vld [vmem:[#allocation2 + $0x114] sm:$0xf]
    %v134 = vld [vmem:[#allocation2 + $0x118] sm:$0xf]
    %v135 = vld [vmem:[#allocation2 + $0x11c] sm:$0xf]
    %v136 = vld [vmem:[#allocation2 + $0x120] sm:$0xf]
    %v137 = vld [vmem:[#allocation2 + $0x124] sm:$0xf]
    %v138 = vld [vmem:[#allocation2 + $0x128] sm:$0xf]
    %v139 = vld [vmem:[#allocation2 + $0x12c] sm:$0xf]
    %v140 = vld [vmem:[#allocation2 + $0x130] sm:$0xf]
    %v141 = vld [vmem:[#allocation2 + $0x134] sm:$0xf]
    %v142 = vld [vmem:[#allocation2 + $0x138] sm:$0xf]
    %v143 = vld [vmem:[#allocation2 + $0x13c] sm:$0xf]
    %v144 = vld [vmem:[#allocation2 + $0x140] sm:$0xf]
    %v145 = vld [vmem:[#allocation2 + $0x144] sm:$0xf]
    %v146 = vld [vmem:[#allocation2 + $0x148] sm:$0xf]
    %v147 = vld [vmem:[#allocation2 + $0x14c] sm:$0xf]
    %v148 = vld [vmem:[#allocation2 + $0x150] sm:$0xf]
    %v149 = vld [vmem:[#allocation2 + $0x154] sm:$0xf]
    %v150 = vld [vmem:[#allocation2 + $0x158] sm:$0xf]
    %v151 = vld [vmem:[#allocation2 + $0x15c] sm:$0xf]
    %v152 = vld [vmem:[#allocation2 + $0x160] sm:$0xf]
    %v153 = vld [vmem:[#allocation2 + $0x164] sm:$0xf]
    %v154 = vld [vmem:[#allocation2 + $0x168] sm:$0xf]
    %v155 = vld [vmem:[#allocation2 + $0x16c] sm:$0xf]
    %v156 = vld [vmem:[#allocation2 + $0x170] sm:$0xf]
    %v157 = vld [vmem:[#allocation2 + $0x174] sm:$0xf]
    %v158 = vld [vmem:[#allocation2 + $0x178] sm:$0xf]
    %v159 = vld [vmem:[#allocation2 + $0x17c] sm:$0xf]
    %v160 = vld [vmem:[#allocation2 + $0x180] sm:$0xf]
    %v161 = vld [vmem:[#allocation2 + $0x184] sm:$0xf]
    %v162 = vld [vmem:[#allocation2 + $0x188] sm:$0xf]
    %v163 = vld [vmem:[#allocation2 + $0x18c] sm:$0xf]
    %v164 = vld [vmem:[#allocation2 + $0x190] sm:$0xf]
    %v165 = vld [vmem:[#allocation2 + $0x194] sm:$0xf]
    %v166 = vld [vmem:[#allocation2 + $0x198] sm:$0xf]
    %v167 = vld [vmem:[#allocation2 + $0x19c] sm:$0xf]
    %v168 = vld [vmem:[#allocation2 + $0x1a0] sm:$0xf]
    %v169 = vld [vmem:[#allocation2 + $0x1a4] sm:$0xf]
    %v170 = vld [vmem:[#allocation2 + $0x1a8] sm:$0xf]
    %v171 = vld [vmem:[#allocation2 + $0x1ac] sm:$0xf]
    %v172 = vld [vmem:[#allocation2 + $0x1b0] sm:$0xf]
    %v173 = vld [vmem:[#allocation2 + $0x1b4] sm:$0xf]
    %v174 = vld [vmem:[#allocation2 + $0x1b8] sm:$0xf]
    %v175 = vld [vmem:[#allocation2 + $0x1bc] sm:$0xf]
    %v176 = vld [vmem:[#allocation2 + $0x1c0] sm:$0xf]
    %v177 = vld [vmem:[#allocation2 + $0x1c4] sm:$0xf]
    %v178 = vld [vmem:[#allocation2 + $0x1c8] sm:$0xf]
    %v179 = vld [vmem:[#allocation2 + $0x1cc] sm:$0xf]
    %v180 = vld [vmem:[#allocation2 + $0x1d0] sm:$0xf]
    %v181 = vld [vmem:[#allocation2 + $0x1d4] sm:$0xf]
    %v182 = vld [vmem:[#allocation2 + $0x1d8] sm:$0xf]
    %v183 = vld [vmem:[#allocation2 + $0x1dc] sm:$0xf]
    %v184 = vld [vmem:[#allocation2 + $0x1e0] sm:$0xf]
    %v185 = vld [vmem:[#allocation2 + $0x1e4] sm:$0xf]
    %v186 = vld [vmem:[#allocation2 + $0x1e8] sm:$0xf]
    %v187 = vld [vmem:[#allocation2 + $0x1ec] sm:$0xf]
    %v188 = vld [vmem:[#allocation2 + $0x1f0] sm:$0xf]
    %v189 = vld [vmem:[#allocation2 + $0x1f4] sm:$0xf]
    %v190 = vld [vmem:[#allocation2 + $0x1f8] sm:$0xf]
    %v191 = vld [vmem:[#allocation2 + $0x1fc] sm:$0xf]
    %v192 = vld [vmem:[#allocation7] sm:$0xf]
    %v193 = vld [vmem:[#allocation7 + $0x4] sm:$0xf]
    %v194 = vld [vmem:[#allocation7 + $0x8] sm:$0xf]
    %v195 = vld [vmem:[#allocation7 + $0xc] sm:$0xf]
    %v196 = vld [vmem:[#allocation7 + $0x10] sm:$0xf]
    %v197 = vld [vmem:[#allocation7 + $0x14] sm:$0xf]
    %v198 = vld [vmem:[#allocation7 + $0x18] sm:$0xf]
    %v199 = vld [vmem:[#allocation7 + $0x1c] sm:$0xf]
    %v200 = vld [vmem:[#allocation7 + $0x20] sm:$0xf]
    %v201 = vld [vmem:[#allocation7 + $0x24] sm:$0xf]
    %v202 = vld [vmem:[#allocation7 + $0x28] sm:$0xf]
    %v203 = vld [vmem:[#allocation7 + $0x2c] sm:$0xf]
    %v204 = vld [vmem:[#allocation7 + $0x30] sm:$0xf]
    %v205 = vld [vmem:[#allocation7 + $0x34] sm:$0xf]
    %v206 = vld [vmem:[#allocation7 + $0x38] sm:$0xf]
    %v207 = vld [vmem:[#allocation7 + $0x3c] sm:$0xf]
    %v208 = vld [vmem:[%s3] sm:$0x1]
    %v210 = vlaneseq
    %v211 = vshrl.u32 %v210, 7
    %v212 = vsub.s32 0, %v211
    %v213 = vrot.slane %v208, %v212
    %v343 = vunpack.c.l.b16 %v64
    %v344 = vunpack.c.l.b16 %v65
    %v345 = vunpack.c.l.b16 %v66
    %v346 = vunpack.c.l.b16 %v67
    %v347 = vunpack.c.l.b16 %v68
    %v348 = vunpack.c.l.b16 %v69
    %v349 = vunpack.c.l.b16 %v70
    %v350 = vunpack.c.l.b16 %v71
    %v351 = vunpack.c.l.b16 %v72
    %v352 = vunpack.c.l.b16 %v73
    %v353 = vunpack.c.l.b16 %v74
    %v354 = vunpack.c.l.b16 %v75
    %v355 = vunpack.c.l.b16 %v76
    %v356 = vunpack.c.l.b16 %v77
    %v357 = vunpack.c.l.b16 %v78
    %v358 = vunpack.c.l.b16 %v79
    %v359 = vunpack.c.l.b16 %v80
    %v360 = vunpack.c.l.b16 %v81
    %v361 = vunpack.c.l.b16 %v82
    %v362 = vunpack.c.l.b16 %v83
    %v363 = vunpack.c.l.b16 %v84
    %v364 = vunpack.c.l.b16 %v85
    %v365 = vunpack.c.l.b16 %v86
    %v366 = vunpack.c.l.b16 %v87
    %v367 = vunpack.c.l.b16 %v88
    %v368 = vunpack.c.l.b16 %v89
    %v369 = vunpack.c.l.b16 %v90
    %v370 = vunpack.c.l.b16 %v91
    %v371 = vunpack.c.l.b16 %v92
    %v372 = vunpack.c.l.b16 %v93
    %v373 = vunpack.c.l.b16 %v94
    %v374 = vunpack.c.l.b16 %v95
    %v375 = vunpack.c.l.b16 %v96
    %v376 = vunpack.c.l.b16 %v97
    %v377 = vunpack.c.l.b16 %v98
    %v378 = vunpack.c.l.b16 %v99
    %v379 = vunpack.c.l.b16 %v100
    %v380 = vunpack.c.l.b16 %v101
    %v381 = vunpack.c.l.b16 %v102
    %v382 = vunpack.c.l.b16 %v103
    %v383 = vunpack.c.l.b16 %v104
    %v384 = vunpack.c.l.b16 %v105
    %v385 = vunpack.c.l.b16 %v106
    %v386 = vunpack.c.l.b16 %v107
    %v387 = vunpack.c.l.b16 %v108
    %v388 = vunpack.c.l.b16 %v109
    %v389 = vunpack.c.l.b16 %v110
    %v390 = vunpack.c.l.b16 %v111
    %v391 = vunpack.c.l.b16 %v112
    %v392 = vunpack.c.l.b16 %v113
    %v393 = vunpack.c.l.b16 %v114
    %v394 = vunpack.c.l.b16 %v115
    %v395 = vunpack.c.l.b16 %v116
    %v396 = vunpack.c.l.b16 %v117
    %v397 = vunpack.c.l.b16 %v118
    %v398 = vunpack.c.l.b16 %v119
    %v399 = vunpack.c.l.b16 %v120
    %v400 = vunpack.c.l.b16 %v121
    %v401 = vunpack.c.l.b16 %v122
    %v402 = vunpack.c.l.b16 %v123
    %v403 = vunpack.c.l.b16 %v124
    %v404 = vunpack.c.l.b16 %v125
    %v405 = vunpack.c.l.b16 %v126
    %v406 = vunpack.c.l.b16 %v127
    %v407 = vunpack.c.l.b16 %v128
    %v408 = vunpack.c.l.b16 %v129
    %v409 = vunpack.c.l.b16 %v130
    %v410 = vunpack.c.l.b16 %v131
    %v411 = vunpack.c.l.b16 %v132
    %v412 = vunpack.c.l.b16 %v133
    %v413 = vunpack.c.l.b16 %v134
    %v414 = vunpack.c.l.b16 %v135
    %v415 = vunpack.c.l.b16 %v136
    %v416 = vunpack.c.l.b16 %v137
    %v417 = vunpack.c.l.b16 %v138
    %v418 = vunpack.c.l.b16 %v139
    %v419 = vunpack.c.l.b16 %v140
    %v420 = vunpack.c.l.b16 %v141
    %v421 = vunpack.c.l.b16 %v142
    %v422 = vunpack.c.l.b16 %v143
    %v423 = vunpack.c.l.b16 %v144
    %v424 = vunpack.c.l.b16 %v145
    %v425 = vunpack.c.l.b16 %v146
    %v426 = vunpack.c.l.b16 %v147
    %v427 = vunpack.c.l.b16 %v148
    %v428 = vunpack.c.l.b16 %v149
    %v429 = vunpack.c.l.b16 %v150
    %v430 = vunpack.c.l.b16 %v151
    %v431 = vunpack.c.l.b16 %v152
    %v432 = vunpack.c.l.b16 %v153
    %v433 = vunpack.c.l.b16 %v154
    %v434 = vunpack.c.l.b16 %v155
    %v435 = vunpack.c.l.b16 %v156
    %v436 = vunpack.c.l.b16 %v157
    %v437 = vunpack.c.l.b16 %v158
    %v438 = vunpack.c.l.b16 %v159
    %v439 = vunpack.c.l.b16 %v160
    %v440 = vunpack.c.l.b16 %v161
    %v441 = vunpack.c.l.b16 %v162
    %v442 = vunpack.c.l.b16 %v163
    %v443 = vunpack.c.l.b16 %v164
    %v444 = vunpack.c.l.b16 %v165
    %v445 = vunpack.c.l.b16 %v166
    %v446 = vunpack.c.l.b16 %v167
    %v447 = vunpack.c.l.b16 %v168
    %v448 = vunpack.c.l.b16 %v169
    %v449 = vunpack.c.l.b16 %v170
    %v450 = vunpack.c.l.b16 %v171
    %v451 = vunpack.c.l.b16 %v172
    %v452 = vunpack.c.l.b16 %v173
    %v453 = vunpack.c.l.b16 %v174
    %v454 = vunpack.c.l.b16 %v175
    %v455 = vunpack.c.l.b16 %v176
    %v456 = vunpack.c.l.b16 %v177
    %v457 = vunpack.c.l.b16 %v178
    %v458 = vunpack.c.l.b16 %v179
    %v459 = vunpack.c.l.b16 %v180
    %v460 = vunpack.c.l.b16 %v181
    %v461 = vunpack.c.l.b16 %v182
    %v462 = vunpack.c.l.b16 %v183
    %v463 = vunpack.c.l.b16 %v184
    %v464 = vunpack.c.l.b16 %v185
    %v465 = vunpack.c.l.b16 %v186
    %v466 = vunpack.c.l.b16 %v187
    %v467 = vunpack.c.l.b16 %v188
    %v468 = vunpack.c.l.b16 %v189
    %v469 = vunpack.c.l.b16 %v190
    %v470 = vunpack.c.l.b16 %v191
    %v471 = vpack.c.b16 %v344, %v343
    %v472 = vpack.c.b16 %v346, %v345
    %v473 = vpack.c.b16 %v348, %v347
    %v474 = vpack.c.b16 %v350, %v349
    %v475 = vpack.c.b16 %v352, %v351
    %v476 = vpack.c.b16 %v354, %v353
    %v477 = vpack.c.b16 %v356, %v355
    %v478 = vpack.c.b16 %v358, %v357
    %v479 = vpack.c.b16 %v360, %v359
    %v480 = vpack.c.b16 %v362, %v361
    %v481 = vpack.c.b16 %v364, %v363
    %v482 = vpack.c.b16 %v366, %v365
    %v483 = vpack.c.b16 %v368, %v367
    %v484 = vpack.c.b16 %v370, %v369
    %v485 = vpack.c.b16 %v372, %v371
    %v486 = vpack.c.b16 %v374, %v373
    %v487 = vpack.c.b16 %v376, %v375
    %v488 = vpack.c.b16 %v378, %v377
    %v489 = vpack.c.b16 %v380, %v379
    %v490 = vpack.c.b16 %v382, %v381
    %v491 = vpack.c.b16 %v384, %v383
    %v492 = vpack.c.b16 %v386, %v385
    %v493 = vpack.c.b16 %v388, %v387
    %v494 = vpack.c.b16 %v390, %v389
    %v495 = vpack.c.b16 %v392, %v391
    %v496 = vpack.c.b16 %v394, %v393
    %v497 = vpack.c.b16 %v396, %v395
    %v498 = vpack.c.b16 %v398, %v397
    %v499 = vpack.c.b16 %v400, %v399
    %v500 = vpack.c.b16 %v402, %v401
    %v501 = vpack.c.b16 %v404, %v403
    %v502 = vpack.c.b16 %v406, %v405
    %v503 = vpack.c.b16 %v408, %v407
    %v504 = vpack.c.b16 %v410, %v409
    %v505 = vpack.c.b16 %v412, %v411
    %v506 = vpack.c.b16 %v414, %v413
    %v507 = vpack.c.b16 %v416, %v415
    %v508 = vpack.c.b16 %v418, %v417
    %v509 = vpack.c.b16 %v420, %v419
    %v510 = vpack.c.b16 %v422, %v421
    %v511 = vpack.c.b16 %v424, %v423
    %v512 = vpack.c.b16 %v426, %v425
    %v513 = vpack.c.b16 %v428, %v427
    %v514 = vpack.c.b16 %v430, %v429
    %v515 = vpack.c.b16 %v432, %v431
    %v516 = vpack.c.b16 %v434, %v433
    %v517 = vpack.c.b16 %v436, %v435
    %v518 = vpack.c.b16 %v438, %v437
    %v519 = vpack.c.b16 %v440, %v439
    %v520 = vpack.c.b16 %v442, %v441
    %v521 = vpack.c.b16 %v444, %v443
    %v522 = vpack.c.b16 %v446, %v445
    %v523 = vpack.c.b16 %v448, %v447
    %v524 = vpack.c.b16 %v450, %v449
    %v525 = vpack.c.b16 %v452, %v451
    %v526 = vpack.c.b16 %v454, %v453
    %v527 = vpack.c.b16 %v456, %v455
    %v528 = vpack.c.b16 %v458, %v457
    %v529 = vpack.c.b16 %v460, %v459
    %v530 = vpack.c.b16 %v462, %v461
    %v531 = vpack.c.b16 %v464, %v463
    %v532 = vpack.c.b16 %v466, %v465
    %v533 = vpack.c.b16 %v468, %v467
    %v534 = vpack.c.b16 %v470, %v469
    %v615 = vunpack.c.l.b16 %v192
    %v616 = vunpack.c.l.b16 %v193
    %v617 = vunpack.c.l.b16 %v194
    %v618 = vunpack.c.l.b16 %v195
    %v619 = vunpack.c.l.b16 %v196
    %v620 = vunpack.c.l.b16 %v197
    %v621 = vunpack.c.l.b16 %v198
    %v622 = vunpack.c.l.b16 %v199
    %v623 = vunpack.c.l.b16 %v200
    %v624 = vunpack.c.l.b16 %v201
    %v625 = vunpack.c.l.b16 %v202
    %v626 = vunpack.c.l.b16 %v203
    %v627 = vunpack.c.l.b16 %v204
    %v628 = vunpack.c.l.b16 %v205
    %v629 = vunpack.c.l.b16 %v206
    %v630 = vunpack.c.l.b16 %v207
    %v631 = vpack.c.b16 %v616, %v615
    %v632 = vpack.c.b16 %v618, %v617
    %v633 = vpack.c.b16 %v620, %v619
    %v634 = vpack.c.b16 %v622, %v621
    %v635 = vpack.c.b16 %v624, %v623
    %v636 = vpack.c.b16 %v626, %v625
    %v637 = vpack.c.b16 %v628, %v627
    %v638 = vpack.c.b16 %v630, %v629
    %647 = vmatprep.subr.bf16.mxu0 0
    %648 = vmatpush1.bf16.msra.mxu0 %v631
    %649 = vmatprep.subr.bf16.mxu0 0
    %650 = vmatpush1.bf16.msra.mxu0 %v632
    %651 = vmatprep.subr.bf16.mxu0 0
    %652 = vmatpush1.bf16.msra.mxu0 %v633
    %653 = vmatprep.subr.bf16.mxu0 0
    %654 = vmatpush1.bf16.msra.mxu0 %v634
    %655 = vmatprep.subr.bf16.mxu0 0
    %656 = vmatpush1.bf16.msra.mxu0 %v635
    %657 = vmatprep.subr.bf16.mxu0 0
    %658 = vmatpush1.bf16.msra.mxu0 %v636
    %659 = vmatprep.subr.bf16.mxu0 0
    %660 = vmatpush1.bf16.msra.mxu0 %v637
    %661 = vmatprep.subr.bf16.mxu0 0
    %662 = vmatpush1.bf16.msra.mxu0 %v638
    %663 = vmatprep.subr.bf16.mxu0 0
    %664 = vmatpush1.bf16.msra.mxu0 0
    %665 = vmatprep.subr.bf16.mxu0 0
    %666 = vmatpush1.bf16.msra.mxu0 0
    %667 = vmatprep.subr.bf16.mxu0 0
    %668 = vmatpush1.bf16.msra.mxu0 0
    %669 = vmatprep.subr.bf16.mxu0 0
    %670 = vmatpush1.bf16.msra.mxu0 0
    %671 = vmatprep.subr.bf16.mxu0 0
    %672 = vmatpush1.bf16.msra.mxu0 0
    %673 = vmatprep.subr.bf16.mxu0 0
    %674 = vmatpush1.bf16.msra.mxu0 0
    %675 = vmatprep.subr.bf16.mxu0 0
    %676 = vmatpush1.bf16.msra.mxu0 0
    %677 = vmatprep.subr.bf16.mxu0 0
    %678 = vmatpush1.bf16.msra.mxu0 0
    %679 = vmatprep.mubr.bf16.mxu0 0
    %680 = vmatmul.mubr.bf16.gmra.mrb[0].mxu0 %v471
    %v681 = vpop.f32.mrb[0].mxu0
    %v682 = vadd.f32 %v213, %v681
    %v683 = vpop.f32.mrb[0].mxu0
    %v684 = vpop.f32.mrb[0].mxu0
    %v685 = vadd.f32 %v213, %v684
    %v686 = vpop.f32.mrb[0].mxu0
    %687 = vmatprep.mubr.bf16.mxu0 0
    %688 = vmatmul.mubr.bf16.gmra.mrb[0].mxu0 %v472
    %v689 = vpop.f32.mrb[0].mxu0
    %v690 = vadd.f32 %v213, %v689
    %v691 = vpop.f32.mrb[0].mxu0
    %v692 = vpop.f32.mrb[0].mxu0
    %v693 = vadd.f32 %v213, %v692
    %v694 = vpop.f32.mrb[0].mxu0
    %695 = vmatprep.mubr.bf16.mxu0 0
    %696 = vmatmul.mubr.bf16.gmra.mrb[0].mxu0 %v473
    %v697 = vpop.f32.mrb[0].mxu0
    %v698 = vadd.f32 %v213, %v697
    %v699 = vpop.f32.mrb[0].mxu0
    %v700 = vpop.f32.mrb[0].mxu0
    %v701 = vadd.f32 %v213, %v700
    %v702 = vpop.f32.mrb[0].mxu0
    %703 = vmatprep.mubr.bf16.mxu0 0
    %704 = vmatmul.mubr.bf16.gmra.mrb[0].mxu0 %v474
    %v705 = vpop.f32.mrb[0].mxu0
    %v706 = vadd.f32 %v213, %v705
    %v707 = vpop.f32.mrb[0].mxu0
    %v708 = vpop.f32.mrb[0].mxu0
    %v709 = vadd.f32 %v213, %v708
    %v710 = vpop.f32.mrb[0].mxu0
    %711 = vmatprep.mubr.bf16.mxu0 0
    %712 = vmatmul.mubr.bf16.gmra.mrb[0].mxu0 %v475
    %v713 = vpop.f32.mrb[0].mxu0
    %v714 = vadd.f32 %v213, %v713
    %v715 = vpop.f32.mrb[0].mxu0
    %v716 = vpop.f32.mrb[0].mxu0
    %v717 = vadd.f32 %v213, %v716
    %v718 = vpop.f32.mrb[0].mxu0
    %719 = vmatprep.mubr.bf16.mxu0 0
    %720 = vmatmul.mubr.bf16.gmra.mrb[0].mxu0 %v476
    %v721 = vpop.f32.mrb[0].mxu0
    %v722 = vadd.f32 %v213, %v721
    %v723 = vpop.f32.mrb[0].mxu0
    %v724 = vpop.f32.mrb[0].mxu0
    %v725 = vadd.f32 %v213, %v724
    %v726 = vpop.f32.mrb[0].mxu0
    %727 = vmatprep.mubr.bf16.mxu0 0
    %728 = vmatmul.mubr.bf16.gmra.mrb[0].mxu0 %v477
    %v729 = vpop.f32.mrb[0].mxu0
    %v730 = vadd.f32 %v213, %v729
    %v731 = vpop.f32.mrb[0].mxu0
    %v732 = vpop.f32.mrb[0].mxu0
    %v733 = vadd.f32 %v213, %v732
    %v734 = vpop.f32.mrb[0].mxu0
    %735 = vmatprep.mubr.bf16.mxu0 0
    %736 = vmatmul.mubr.bf16.gmra.mrb[0].mxu0 %v478
    %v737 = vpop.f32.mrb[0].mxu0
    %v738 = vadd.f32 %v213, %v737
    %v739 = vpop.f32.mrb[0].mxu0
    %v740 = vpop.f32.mrb[0].mxu0
    %v741 = vadd.f32 %v213, %v740
    %v742 = vpop.f32.mrb[0].mxu0
    %743 = vmatprep.mubr.bf16.mxu0 0
    %744 = vmatmul.mubr.bf16.gmra.mrb[0].mxu0 %v479
    %v745 = vpop.f32.mrb[0].mxu0
    %v746 = vadd.f32 %v213, %v745
    %v747 = vpop.f32.mrb[0].mxu0
    %v748 = vpop.f32.mrb[0].mxu0
    %v749 = vadd.f32 %v213, %v748
    %v750 = vpop.f32.mrb[0].mxu0
    %751 = vmatprep.mubr.bf16.mxu0 0
    %752 = vmatmul.mubr.bf16.gmra.mrb[0].mxu0 %v480
    %v753 = vpop.f32.mrb[0].mxu0
    %v754 = vadd.f32 %v213, %v753
    %v755 = vpop.f32.mrb[0].mxu0
    %v756 = vpop.f32.mrb[0].mxu0
    %v757 = vadd.f32 %v213, %v756
    %v758 = vpop.f32.mrb[0].mxu0
    %759 = vmatprep.mubr.bf16.mxu0 0
    %760 = vmatmul.mubr.bf16.gmra.mrb[0].mxu0 %v481
    %v761 = vpop.f32.mrb[0].mxu0
    %v762 = vadd.f32 %v213, %v761
    %v763 = vpop.f32.mrb[0].mxu0
    %v764 = vpop.f32.mrb[0].mxu0
    %v765 = vadd.f32 %v213, %v764
    %v766 = vpop.f32.mrb[0].mxu0
    %767 = vmatprep.mubr.bf16.mxu0 0
    %768 = vmatmul.mubr.bf16.gmra.mrb[0].mxu0 %v482
    %v769 = vpop.f32.mrb[0].mxu0
    %v770 = vadd.f32 %v213, %v769
    %v771 = vpop.f32.mrb[0].mxu0
    %v772 = vpop.f32.mrb[0].mxu0
    %v773 = vadd.f32 %v213, %v772
    %v774 = vpop.f32.mrb[0].mxu0
    %775 = vmatprep.mubr.bf16.mxu0 0
    %776 = vmatmul.mubr.bf16.gmra.mrb[0].mxu0 %v483
    %v777 = vpop.f32.mrb[0].mxu0
    %v778 = vadd.f32 %v213, %v777
    %v779 = vpop.f32.mrb[0].mxu0
    %v780 = vpop.f32.mrb[0].mxu0
    %v781 = vadd.f32 %v213, %v780
    %v782 = vpop.f32.mrb[0].mxu0
    %783 = vmatprep.mubr.bf16.mxu0 0
    %784 = vmatmul.mubr.bf16.gmra.mrb[0].mxu0 %v484
    %v785 = vpop.f32.mrb[0].mxu0
    %v786 = vadd.f32 %v213, %v785
    %v787 = vpop.f32.mrb[0].mxu0
    %v788 = vpop.f32.mrb[0].mxu0
    %v789 = vadd.f32 %v213, %v788
    %v790 = vpop.f32.mrb[0].mxu0
    %791 = vmatprep.mubr.bf16.mxu0 0
    %792 = vmatmul.mubr.bf16.gmra.mrb[0].mxu0 %v485
    %v793 = vpop.f32.mrb[0].mxu0
    %v794 = vadd.f32 %v213, %v793
    %v795 = vpop.f32.mrb[0].mxu0
    %v796 = vpop.f32.mrb[0].mxu0
    %v797 = vadd.f32 %v213, %v796
    %v798 = vpop.f32.mrb[0].mxu0
    %799 = vmatprep.mubr.bf16.mxu0 0
    %800 = vmatmul.mubr.bf16.gmra.mrb[0].mxu0 %v486
    %v801 = vpop.f32.mrb[0].mxu0
    %v802 = vadd.f32 %v213, %v801
    %v803 = vpop.f32.mrb[0].mxu0
    %v804 = vpop.f32.mrb[0].mxu0
    %v805 = vadd.f32 %v213, %v804
    %v806 = vpop.f32.mrb[0].mxu0
    %807 = vmatprep.mubr.bf16.mxu0 0
    %808 = vmatmul.mubr.bf16.gmra.mrb[0].mxu0 %v487
    %v809 = vpop.f32.mrb[0].mxu0
    %v810 = vadd.f32 %v213, %v809
    %v811 = vpop.f32.mrb[0].mxu0
    %v812 = vpop.f32.mrb[0].mxu0
    %v813 = vadd.f32 %v213, %v812
    %v814 = vpop.f32.mrb[0].mxu0
    %815 = vmatprep.mubr.bf16.mxu0 0
    %816 = vmatmul.mubr.bf16.gmra.mrb[0].mxu0 %v488
    %v817 = vpop.f32.mrb[0].mxu0
    %v818 = vadd.f32 %v213, %v817
    %v819 = vpop.f32.mrb[0].mxu0
    %v820 = vpop.f32.mrb[0].mxu0
    %v821 = vadd.f32 %v213, %v820
    %v822 = vpop.f32.mrb[0].mxu0
    %823 = vmatprep.mubr.bf16.mxu0 0
    %824 = vmatmul.mubr.bf16.gmra.mrb[0].mxu0 %v489
    %v825 = vpop.f32.mrb[0].mxu0
    %v826 = vadd.f32 %v213, %v825
    %v827 = vpop.f32.mrb[0].mxu0
    %v828 = vpop.f32.mrb[0].mxu0
    %v829 = vadd.f32 %v213, %v828
    %v830 = vpop.f32.mrb[0].mxu0
    %831 = vmatprep.mubr.bf16.mxu0 0
    %832 = vmatmul.mubr.bf16.gmra.mrb[0].mxu0 %v490
    %v833 = vpop.f32.mrb[0].mxu0
    %v834 = vadd.f32 %v213, %v833
    %v835 = vpop.f32.mrb[0].mxu0
    %v836 = vpop.f32.mrb[0].mxu0
    %v837 = vadd.f32 %v213, %v836
    %v838 = vpop.f32.mrb[0].mxu0
    %839 = vmatprep.mubr.bf16.mxu0 0
    %840 = vmatmul.mubr.bf16.gmra.mrb[0].mxu0 %v491
    %v841 = vpop.f32.mrb[0].mxu0
    %v842 = vadd.f32 %v213, %v841
    %v843 = vpop.f32.mrb[0].mxu0
    %v844 = vpop.f32.mrb[0].mxu0
    %v845 = vadd.f32 %v213, %v844
    %v846 = vpop.f32.mrb[0].mxu0
    %847 = vmatprep.mubr.bf16.mxu0 0
    %848 = vmatmul.mubr.bf16.gmra.mrb[0].mxu0 %v492
    %v849 = vpop.f32.mrb[0].mxu0
    %v850 = vadd.f32 %v213, %v849
    %v851 = vpop.f32.mrb[0].mxu0
    %v852 = vpop.f32.mrb[0].mxu0
    %v853 = vadd.f32 %v213, %v852
    %v854 = vpop.f32.mrb[0].mxu0
    %855 = vmatprep.mubr.bf16.mxu0 0
    %856 = vmatmul.mubr.bf16.gmra.mrb[0].mxu0 %v493
    %v857 = vpop.f32.mrb[0].mxu0
    %v858 = vadd.f32 %v213, %v857
    %v859 = vpop.f32.mrb[0].mxu0
    %v860 = vpop.f32.mrb[0].mxu0
    %v861 = vadd.f32 %v213, %v860
    %v862 = vpop.f32.mrb[0].mxu0
    %863 = vmatprep.mubr.bf16.mxu0 0
    %864 = vmatmul.mubr.bf16.gmra.mrb[0].mxu0 %v494
    %v865 = vpop.f32.mrb[0].mxu0
    %v866 = vadd.f32 %v213, %v865
    %v867 = vpop.f32.mrb[0].mxu0
    %v868 = vpop.f32.mrb[0].mxu0
    %v869 = vadd.f32 %v213, %v868
    %v870 = vpop.f32.mrb[0].mxu0
    %871 = vmatprep.mubr.bf16.mxu0 0
    %872 = vmatmul.mubr.bf16.gmra.mrb[0].mxu0 %v495
    %v873 = vpop.f32.mrb[0].mxu0
    %v874 = vadd.f32 %v213, %v873
    %v875 = vpop.f32.mrb[0].mxu0
    %v876 = vpop.f32.mrb[0].mxu0
    %v877 = vadd.f32 %v213, %v876
    %v878 = vpop.f32.mrb[0].mxu0
    %879 = vmatprep.mubr.bf16.mxu0 0
    %880 = vmatmul.mubr.bf16.gmra.mrb[0].mxu0 %v496
    %v881 = vpop.f32.mrb[0].mxu0
    %v882 = vadd.f32 %v213, %v881
    %v883 = vpop.f32.mrb[0].mxu0
    %v884 = vpop.f32.mrb[0].mxu0
    %v885 = vadd.f32 %v213, %v884
    %v886 = vpop.f32.mrb[0].mxu0
    %887 = vmatprep.mubr.bf16.mxu0 0
    %888 = vmatmul.mubr.bf16.gmra.mrb[0].mxu0 %v497
    %v889 = vpop.f32.mrb[0].mxu0
    %v890 = vadd.f32 %v213, %v889
    %v891 = vpop.f32.mrb[0].mxu0
    %v892 = vpop.f32.mrb[0].mxu0
    %v893 = vadd.f32 %v213, %v892
    %v894 = vpop.f32.mrb[0].mxu0
    %895 = vmatprep.mubr.bf16.mxu0 0
    %896 = vmatmul.mubr.bf16.gmra.mrb[0].mxu0 %v498
    %v897 = vpop.f32.mrb[0].mxu0
    %v898 = vadd.f32 %v213, %v897
    %v899 = vpop.f32.mrb[0].mxu0
    %v900 = vpop.f32.mrb[0].mxu0
    %v901 = vadd.f32 %v213, %v900
    %v902 = vpop.f32.mrb[0].mxu0
    %903 = vmatprep.mubr.bf16.mxu0 0
    %904 = vmatmul.mubr.bf16.gmra.mrb[0].mxu0 %v499
    %v905 = vpop.f32.mrb[0].mxu0
    %v906 = vadd.f32 %v213, %v905
    %v907 = vpop.f32.mrb[0].mxu0
    %v908 = vpop.f32.mrb[0].mxu0
    %v909 = vadd.f32 %v213, %v908
    %v910 = vpop.f32.mrb[0].mxu0
    %911 = vmatprep.mubr.bf16.mxu0 0
    %912 = vmatmul.mubr.bf16.gmra.mrb[0].mxu0 %v500
    %v913 = vpop.f32.mrb[0].mxu0
    %v914 = vadd.f32 %v213, %v913
    %v915 = vpop.f32.mrb[0].mxu0
    %v916 = vpop.f32.mrb[0].mxu0
    %v917 = vadd.f32 %v213, %v916
    %v918 = vpop.f32.mrb[0].mxu0
    %919 = vmatprep.mubr.bf16.mxu0 0
    %920 = vmatmul.mubr.bf16.gmra.mrb[0].mxu0 %v501
    %v921 = vpop.f32.mrb[0].mxu0
    %v922 = vadd.f32 %v213, %v921
    %v923 = vpop.f32.mrb[0].mxu0
    %v924 = vpop.f32.mrb[0].mxu0
    %v925 = vadd.f32 %v213, %v924
    %v926 = vpop.f32.mrb[0].mxu0
    %927 = vmatprep.mubr.bf16.mxu0 0
    %928 = vmatmul.mubr.bf16.gmra.mrb[0].mxu0 %v502
    %v929 = vpop.f32.mrb[0].mxu0
    %v930 = vadd.f32 %v213, %v929
    %v931 = vpop.f32.mrb[0].mxu0
    %v932 = vpop.f32.mrb[0].mxu0
    %v933 = vadd.f32 %v213, %v932
    %v934 = vpop.f32.mrb[0].mxu0
    %935 = vmatprep.mubr.bf16.mxu0 0
    %936 = vmatmul.mubr.bf16.gmra.mrb[0].mxu0 %v503
    %v937 = vpop.f32.mrb[0].mxu0
    %v938 = vadd.f32 %v213, %v937
    %v939 = vpop.f32.mrb[0].mxu0
    %v940 = vpop.f32.mrb[0].mxu0
    %v941 = vadd.f32 %v213, %v940
    %v942 = vpop.f32.mrb[0].mxu0
    %943 = vmatprep.mubr.bf16.mxu0 0
    %944 = vmatmul.mubr.bf16.gmra.mrb[0].mxu0 %v504
    %v945 = vpop.f32.mrb[0].mxu0
    %v946 = vadd.f32 %v213, %v945
    %v947 = vpop.f32.mrb[0].mxu0
    %v948 = vpop.f32.mrb[0].mxu0
    %v949 = vadd.f32 %v213, %v948
    %v950 = vpop.f32.mrb[0].mxu0
    %951 = vmatprep.mubr.bf16.mxu0 0
    %952 = vmatmul.mubr.bf16.gmra.mrb[0].mxu0 %v505
    %v953 = vpop.f32.mrb[0].mxu0
    %v954 = vadd.f32 %v213, %v953
    %v955 = vpop.f32.mrb[0].mxu0
    %v956 = vpop.f32.mrb[0].mxu0
    %v957 = vadd.f32 %v213, %v956
    %v958 = vpop.f32.mrb[0].mxu0
    %959 = vmatprep.mubr.bf16.mxu0 0
    %960 = vmatmul.mubr.bf16.gmra.mrb[0].mxu0 %v506
    %v961 = vpop.f32.mrb[0].mxu0
    %v962 = vadd.f32 %v213, %v961
    %v963 = vpop.f32.mrb[0].mxu0
    %v964 = vpop.f32.mrb[0].mxu0
    %v965 = vadd.f32 %v213, %v964
    %v966 = vpop.f32.mrb[0].mxu0
    %967 = vmatprep.mubr.bf16.mxu0 0
    %968 = vmatmul.mubr.bf16.gmra.mrb[0].mxu0 %v507
    %v969 = vpop.f32.mrb[0].mxu0
    %v970 = vadd.f32 %v213, %v969
    %v971 = vpop.f32.mrb[0].mxu0
    %v972 = vpop.f32.mrb[0].mxu0
    %v973 = vadd.f32 %v213, %v972
    %v974 = vpop.f32.mrb[0].mxu0
    %975 = vmatprep.mubr.bf16.mxu0 0
    %976 = vmatmul.mubr.bf16.gmra.mrb[0].mxu0 %v508
    %v977 = vpop.f32.mrb[0].mxu0
    %v978 = vadd.f32 %v213, %v977
    %v979 = vpop.f32.mrb[0].mxu0
    %v980 = vpop.f32.mrb[0].mxu0
    %v981 = vadd.f32 %v213, %v980
    %v982 = vpop.f32.mrb[0].mxu0
    %983 = vmatprep.mubr.bf16.mxu0 0
    %984 = vmatmul.mubr.bf16.gmra.mrb[0].mxu0 %v509
    %v985 = vpop.f32.mrb[0].mxu0
    %v986 = vadd.f32 %v213, %v985
    %v987 = vpop.f32.mrb[0].mxu0
    %v988 = vpop.f32.mrb[0].mxu0
    %v989 = vadd.f32 %v213, %v988
    %v990 = vpop.f32.mrb[0].mxu0
    %991 = vmatprep.mubr.bf16.mxu0 0
    %992 = vmatmul.mubr.bf16.gmra.mrb[0].mxu0 %v510
    %v993 = vpop.f32.mrb[0].mxu0
    %v994 = vadd.f32 %v213, %v993
    %v995 = vpop.f32.mrb[0].mxu0
    %v996 = vpop.f32.mrb[0].mxu0
    %v997 = vadd.f32 %v213, %v996
    %v998 = vpop.f32.mrb[0].mxu0
    %999 = vmatprep.mubr.bf16.mxu0 0
    %1000 = vmatmul.mubr.bf16.gmra.mrb[0].mxu0 %v511
    %v1001 = vpop.f32.mrb[0].mxu0
    %v1002 = vadd.f32 %v213, %v1001
    %v1003 = vpop.f32.mrb[0].mxu0
    %v1004 = vpop.f32.mrb[0].mxu0
    %v1005 = vadd.f32 %v213, %v1004
    %v1006 = vpop.f32.mrb[0].mxu0
    %1007 = vmatprep.mubr.bf16.mxu0 0
    %1008 = vmatmul.mubr.bf16.gmra.mrb[0].mxu0 %v512
    %v1009 = vpop.f32.mrb[0].mxu0
    %v1010 = vadd.f32 %v213, %v1009
    %v1011 = vpop.f32.mrb[0].mxu0
    %v1012 = vpop.f32.mrb[0].mxu0
    %v1013 = vadd.f32 %v213, %v1012
    %v1014 = vpop.f32.mrb[0].mxu0
    %1015 = vmatprep.mubr.bf16.mxu0 0
    %1016 = vmatmul.mubr.bf16.gmra.mrb[0].mxu0 %v513
    %v1017 = vpop.f32.mrb[0].mxu0
    %v1018 = vadd.f32 %v213, %v1017
    %v1019 = vpop.f32.mrb[0].mxu0
    %v1020 = vpop.f32.mrb[0].mxu0
    %v1021 = vadd.f32 %v213, %v1020
    %v1022 = vpop.f32.mrb[0].mxu0
    %1023 = vmatprep.mubr.bf16.mxu0 0
    %1024 = vmatmul.mubr.bf16.gmra.mrb[0].mxu0 %v514
    %v1025 = vpop.f32.mrb[0].mxu0
    %v1026 = vadd.f32 %v213, %v1025
    %v1027 = vpop.f32.mrb[0].mxu0
    %v1028 = vpop.f32.mrb[0].mxu0
    %v1029 = vadd.f32 %v213, %v1028
    %v1030 = vpop.f32.mrb[0].mxu0
    %1031 = vmatprep.mubr.bf16.mxu0 0
    %1032 = vmatmul.mubr.bf16.gmra.mrb[0].mxu0 %v515
    %v1033 = vpop.f32.mrb[0].mxu0
    %v1034 = vadd.f32 %v213, %v1033
    %v1035 = vpop.f32.mrb[0].mxu0
    %v1036 = vpop.f32.mrb[0].mxu0
    %v1037 = vadd.f32 %v213, %v1036
    %v1038 = vpop.f32.mrb[0].mxu0
    %1039 = vmatprep.mubr.bf16.mxu0 0
    %1040 = vmatmul.mubr.bf16.gmra.mrb[0].mxu0 %v516
    %v1041 = vpop.f32.mrb[0].mxu0
    %v1042 = vadd.f32 %v213, %v1041
    %v1043 = vpop.f32.mrb[0].mxu0
    %v1044 = vpop.f32.mrb[0].mxu0
    %v1045 = vadd.f32 %v213, %v1044
    %v1046 = vpop.f32.mrb[0].mxu0
    %1047 = vmatprep.mubr.bf16.mxu0 0
    %1048 = vmatmul.mubr.bf16.gmra.mrb[0].mxu0 %v517
    %v1049 = vpop.f32.mrb[0].mxu0
    %v1050 = vadd.f32 %v213, %v1049
    %v1051 = vpop.f32.mrb[0].mxu0
    %v1052 = vpop.f32.mrb[0].mxu0
    %v1053 = vadd.f32 %v213, %v1052
    %v1054 = vpop.f32.mrb[0].mxu0
    %1055 = vmatprep.mubr.bf16.mxu0 0
    %1056 = vmatmul.mubr.bf16.gmra.mrb[0].mxu0 %v518
    %v1057 = vpop.f32.mrb[0].mxu0
    %v1058 = vadd.f32 %v213, %v1057
    %v1059 = vpop.f32.mrb[0].mxu0
    %v1060 = vpop.f32.mrb[0].mxu0
    %v1061 = vadd.f32 %v213, %v1060
    %v1062 = vpop.f32.mrb[0].mxu0
    %1063 = vmatprep.mubr.bf16.mxu0 0
    %1064 = vmatmul.mubr.bf16.gmra.mrb[0].mxu0 %v519
    %v1065 = vpop.f32.mrb[0].mxu0
    %v1066 = vadd.f32 %v213, %v1065
    %v1067 = vpop.f32.mrb[0].mxu0
    %v1068 = vpop.f32.mrb[0].mxu0
    %v1069 = vadd.f32 %v213, %v1068
    %v1070 = vpop.f32.mrb[0].mxu0
    %1071 = vmatprep.mubr.bf16.mxu0 0
    %1072 = vmatmul.mubr.bf16.gmra.mrb[0].mxu0 %v520
    %v1073 = vpop.f32.mrb[0].mxu0
    %v1074 = vadd.f32 %v213, %v1073
    %v1075 = vpop.f32.mrb[0].mxu0
    %v1076 = vpop.f32.mrb[0].mxu0
    %v1077 = vadd.f32 %v213, %v1076
    %v1078 = vpop.f32.mrb[0].mxu0
    %1079 = vmatprep.mubr.bf16.mxu0 0
    %1080 = vmatmul.mubr.bf16.gmra.mrb[0].mxu0 %v521
    %v1081 = vpop.f32.mrb[0].mxu0
    %v1082 = vadd.f32 %v213, %v1081
    %v1083 = vpop.f32.mrb[0].mxu0
    %v1084 = vpop.f32.mrb[0].mxu0
    %v1085 = vadd.f32 %v213, %v1084
    %v1086 = vpop.f32.mrb[0].mxu0
    %1087 = vmatprep.mubr.bf16.mxu0 0
    %1088 = vmatmul.mubr.bf16.gmra.mrb[0].mxu0 %v522
    %v1089 = vpop.f32.mrb[0].mxu0
    %v1090 = vadd.f32 %v213, %v1089
    %v1091 = vpop.f32.mrb[0].mxu0
    %v1092 = vpop.f32.mrb[0].mxu0
    %v1093 = vadd.f32 %v213, %v1092
    %v1094 = vpop.f32.mrb[0].mxu0
    %1095 = vmatprep.mubr.bf16.mxu0 0
    %1096 = vmatmul.mubr.bf16.gmra.mrb[0].mxu0 %v523
    %v1097 = vpop.f32.mrb[0].mxu0
    %v1098 = vadd.f32 %v213, %v1097
    %v1099 = vpop.f32.mrb[0].mxu0
    %v1100 = vpop.f32.mrb[0].mxu0
    %v1101 = vadd.f32 %v213, %v1100
    %v1102 = vpop.f32.mrb[0].mxu0
    %1103 = vmatprep.mubr.bf16.mxu0 0
    %1104 = vmatmul.mubr.bf16.gmra.mrb[0].mxu0 %v524
    %v1105 = vpop.f32.mrb[0].mxu0
    %v1106 = vadd.f32 %v213, %v1105
    %v1107 = vpop.f32.mrb[0].mxu0
    %v1108 = vpop.f32.mrb[0].mxu0
    %v1109 = vadd.f32 %v213, %v1108
    %v1110 = vpop.f32.mrb[0].mxu0
    %1111 = vmatprep.mubr.bf16.mxu0 0
    %1112 = vmatmul.mubr.bf16.gmra.mrb[0].mxu0 %v525
    %v1113 = vpop.f32.mrb[0].mxu0
    %v1114 = vadd.f32 %v213, %v1113
    %v1115 = vpop.f32.mrb[0].mxu0
    %v1116 = vpop.f32.mrb[0].mxu0
    %v1117 = vadd.f32 %v213, %v1116
    %v1118 = vpop.f32.mrb[0].mxu0
    %1119 = vmatprep.mubr.bf16.mxu0 0
    %1120 = vmatmul.mubr.bf16.gmra.mrb[0].mxu0 %v526
    %v1121 = vpop.f32.mrb[0].mxu0
    %v1122 = vadd.f32 %v213, %v1121
    %v1123 = vpop.f32.mrb[0].mxu0
    %v1124 = vpop.f32.mrb[0].mxu0
    %v1125 = vadd.f32 %v213, %v1124
    %v1126 = vpop.f32.mrb[0].mxu0
    %1127 = vmatprep.mubr.bf16.mxu0 0
    %1128 = vmatmul.mubr.bf16.gmra.mrb[0].mxu0 %v527
    %v1129 = vpop.f32.mrb[0].mxu0
    %v1130 = vadd.f32 %v213, %v1129
    %v1131 = vpop.f32.mrb[0].mxu0
    %v1132 = vpop.f32.mrb[0].mxu0
    %v1133 = vadd.f32 %v213, %v1132
    %v1134 = vpop.f32.mrb[0].mxu0
    %1135 = vmatprep.mubr.bf16.mxu0 0
    %1136 = vmatmul.mubr.bf16.gmra.mrb[0].mxu0 %v528
    %v1137 = vpop.f32.mrb[0].mxu0
    %v1138 = vadd.f32 %v213, %v1137
    %v1139 = vpop.f32.mrb[0].mxu0
    %v1140 = vpop.f32.mrb[0].mxu0
    %v1141 = vadd.f32 %v213, %v1140
    %v1142 = vpop.f32.mrb[0].mxu0
    %1143 = vmatprep.mubr.bf16.mxu0 0
    %1144 = vmatmul.mubr.bf16.gmra.mrb[0].mxu0 %v529
    %v1145 = vpop.f32.mrb[0].mxu0
    %v1146 = vadd.f32 %v213, %v1145
    %v1147 = vpop.f32.mrb[0].mxu0
    %v1148 = vpop.f32.mrb[0].mxu0
    %v1149 = vadd.f32 %v213, %v1148
    %v1150 = vpop.f32.mrb[0].mxu0
    %1151 = vmatprep.mubr.bf16.mxu0 0
    %1152 = vmatmul.mubr.bf16.gmra.mrb[0].mxu0 %v530
    %v1153 = vpop.f32.mrb[0].mxu0
    %v1154 = vadd.f32 %v213, %v1153
    %v1155 = vpop.f32.mrb[0].mxu0
    %v1156 = vpop.f32.mrb[0].mxu0
    %v1157 = vadd.f32 %v213, %v1156
    %v1158 = vpop.f32.mrb[0].mxu0
    %1159 = vmatprep.mubr.bf16.mxu0 0
    %1160 = vmatmul.mubr.bf16.gmra.mrb[0].mxu0 %v531
    %v1161 = vpop.f32.mrb[0].mxu0
    %v1162 = vadd.f32 %v213, %v1161
    %v1163 = vpop.f32.mrb[0].mxu0
    %v1164 = vpop.f32.mrb[0].mxu0
    %v1165 = vadd.f32 %v213, %v1164
    %v1166 = vpop.f32.mrb[0].mxu0
    %1167 = vmatprep.mubr.bf16.mxu0 0
    %1168 = vmatmul.mubr.bf16.gmra.mrb[0].mxu0 %v532
    %v1169 = vpop.f32.mrb[0].mxu0
    %v1170 = vadd.f32 %v213, %v1169
    %v1171 = vpop.f32.mrb[0].mxu0
    %v1172 = vpop.f32.mrb[0].mxu0
    %v1173 = vadd.f32 %v213, %v1172
    %v1174 = vpop.f32.mrb[0].mxu0
    %1175 = vmatprep.mubr.bf16.mxu0 0
    %1176 = vmatmul.mubr.bf16.gmra.mrb[0].mxu0 %v533
    %v1177 = vpop.f32.mrb[0].mxu0
    %v1178 = vadd.f32 %v213, %v1177
    %v1179 = vpop.f32.mrb[0].mxu0
    %v1180 = vpop.f32.mrb[0].mxu0
    %v1181 = vadd.f32 %v213, %v1180
    %v1182 = vpop.f32.mrb[0].mxu0
    %1183 = vmatprep.mubr.bf16.mxu0 0
    %1184 = vmatmul.mubr.bf16.gmra.mrb[0].mxu0 %v534
    %v1185 = vpop.f32.mrb[0].mxu0
    %v1186 = vadd.f32 %v213, %v1185
    %v1187 = vpop.f32.mrb[0].mxu0
    %v1188 = vpop.f32.mrb[0].mxu0
    %v1189 = vadd.f32 %v213, %v1188
    %v1190 = vpop.f32.mrb[0].mxu0
    %1191 = vdwg.mxu0
    %v1192 = vld [vmem:[#allocation5] sm:$0xff]
    %v1194 = vcombine.high %v1192, %v1192
    %v1196 = vunpack.c.l.s4 1966171168
    %v1197 = vunpack.c.0.s8 %v1196
    %v1198 = vlaneseq
    %v1199 = vshrl.u32 %v1198, 7
    %v1200 = vsub.s32 %v1197, %v1199
    %v1201 = vrot.slane %v1192, %v1200
    %v1203 = vunpack.c.l.s4 1966171168
    %v1204 = vunpack.c.0.s8 %v1203
    %v1205 = vlaneseq
    %v1206 = vshrl.u32 %v1205, 7
    %v1207 = vsub.s32 %v1204, %v1206
    %v1208 = vrot.slane %v1194, %v1207
    %v1209 = vcombine.high %v1201, %v1201
    %v1210 = vcombine.high %v1208, %v1208
    %v1212 = vunpack.c.l.s4 1966171168
    %v1213 = vunpack.c.0.s8 %v1212
    %v1214 = vlaneseq
    %v1215 = vshrl.u32 %v1214, 7
    %v1216 = vsub.s32 %v1213, %v1215
    %v1217 = vrot.slane %v1201, %v1216
    %v1219 = vunpack.c.l.s4 1966171168
    %v1220 = vunpack.c.0.s8 %v1219
    %v1221 = vlaneseq
    %v1222 = vshrl.u32 %v1221, 7
    %v1223 = vsub.s32 %v1220, %v1222
    %v1224 = vrot.slane %v1208, %v1223
    %v1226 = vunpack.c.l.s4 1966171168
    %v1227 = vunpack.c.0.s8 %v1226
    %v1228 = vlaneseq
    %v1229 = vshrl.u32 %v1228, 7
    %v1230 = vsub.s32 %v1227, %v1229
    %v1231 = vrot.slane %v1209, %v1230
    %v1233 = vunpack.c.l.s4 1966171168
    %v1234 = vunpack.c.0.s8 %v1233
    %v1235 = vlaneseq
    %v1236 = vshrl.u32 %v1235, 7
    %v1237 = vsub.s32 %v1234, %v1236
    %v1238 = vrot.slane %v1210, %v1237
    %v1239 = vcombine.high %v1217, %v1217
    %v1240 = vcombine.high %v1224, %v1224
    %v1241 = vcombine.high %v1231, %v1231
    %v1242 = vcombine.high %v1238, %v1238
    %v1243 = vlaneseq
    %v1244 = vshrl.u32 %v1243, 7
    %v1245 = vsub.s32 0, %v1244
    %v1246 = vrot.slane %v1217, %v1245
    %v1247 = vlaneseq
    %v1248 = vshrl.u32 %v1247, 7
    %v1249 = vsub.s32 0, %v1248
    %v1250 = vrot.slane %v1231, %v1249
    %v1251 = vlaneseq
    %v1252 = vshrl.u32 %v1251, 7
    %v1253 = vsub.s32 0, %v1252
    %v1254 = vrot.slane %v1239, %v1253
    %v1255 = vlaneseq
    %v1256 = vshrl.u32 %v1255, 7
    %v1257 = vsub.s32 0, %v1256
    %v1258 = vrot.slane %v1241, %v1257
    %v1259 = vlaneseq
    %v1260 = vshrl.u32 %v1259, 7
    %v1261 = vsub.s32 0, %v1260
    %v1262 = vrot.slane %v1224, %v1261
    %v1263 = vlaneseq
    %v1264 = vshrl.u32 %v1263, 7
    %v1265 = vsub.s32 0, %v1264
    %v1266 = vrot.slane %v1238, %v1265
    %v1267 = vlaneseq
    %v1268 = vshrl.u32 %v1267, 7
    %v1269 = vsub.s32 0, %v1268
    %v1270 = vrot.slane %v1240, %v1269
    %v1271 = vlaneseq
    %v1272 = vshrl.u32 %v1271, 7
    %v1273 = vsub.s32 0, %v1272
    %v1274 = vrot.slane %v1242, %v1273
    %v1283 = vadd.f32 %v682, %v1246
    %v1284 = vadd.f32 %v685, %v1246
    %v1285 = vadd.f32 %v690, %v1246
    %v1286 = vadd.f32 %v693, %v1246
    %v1287 = vadd.f32 %v698, %v1246
    %v1288 = vadd.f32 %v701, %v1246
    %v1289 = vadd.f32 %v706, %v1246
    %v1290 = vadd.f32 %v709, %v1246
    %v1291 = vadd.f32 %v714, %v1246
    %v1292 = vadd.f32 %v717, %v1246
    %v1293 = vadd.f32 %v722, %v1246
    %v1294 = vadd.f32 %v725, %v1246
    %v1295 = vadd.f32 %v730, %v1246
    %v1296 = vadd.f32 %v733, %v1246
    %v1297 = vadd.f32 %v738, %v1246
    %v1298 = vadd.f32 %v741, %v1246
    %v1299 = vadd.f32 %v746, %v1250
    %v1300 = vadd.f32 %v749, %v1250
    %v1301 = vadd.f32 %v754, %v1250
    %v1302 = vadd.f32 %v757, %v1250
    %v1303 = vadd.f32 %v762, %v1250
    %v1304 = vadd.f32 %v765, %v1250
    %v1305 = vadd.f32 %v770, %v1250
    %v1306 = vadd.f32 %v773, %v1250
    %v1307 = vadd.f32 %v778, %v1250
    %v1308 = vadd.f32 %v781, %v1250
    %v1309 = vadd.f32 %v786, %v1250
    %v1310 = vadd.f32 %v789, %v1250
    %v1311 = vadd.f32 %v794, %v1250
    %v1312 = vadd.f32 %v797, %v1250
    %v1313 = vadd.f32 %v802, %v1250
    %v1314 = vadd.f32 %v805, %v1250
    %v1315 = vadd.f32 %v810, %v1254
    %v1316 = vadd.f32 %v813, %v1254
    %v1317 = vadd.f32 %v818, %v1254
    %v1318 = vadd.f32 %v821, %v1254
    %v1319 = vadd.f32 %v826, %v1254
    %v1320 = vadd.f32 %v829, %v1254
    %v1321 = vadd.f32 %v834, %v1254
    %v1322 = vadd.f32 %v837, %v1254
    %v1323 = vadd.f32 %v842, %v1254
    %v1324 = vadd.f32 %v845, %v1254
    %v1325 = vadd.f32 %v850, %v1254
    %v1326 = vadd.f32 %v853, %v1254
    %v1327 = vadd.f32 %v858, %v1254
    %v1328 = vadd.f32 %v861, %v1254
    %v1329 = vadd.f32 %v866, %v1254
    %v1330 = vadd.f32 %v869, %v1254
    %v1331 = vadd.f32 %v874, %v1258
    %v1332 = vadd.f32 %v877, %v1258
    %v1333 = vadd.f32 %v882, %v1258
    %v1334 = vadd.f32 %v885, %v1258
    %v1335 = vadd.f32 %v890, %v1258
    %v1336 = vadd.f32 %v893, %v1258
    %v1337 = vadd.f32 %v898, %v1258
    %v1338 = vadd.f32 %v901, %v1258
    %v1339 = vadd.f32 %v906, %v1258
    %v1340 = vadd.f32 %v909, %v1258
    %v1341 = vadd.f32 %v914, %v1258
    %v1342 = vadd.f32 %v917, %v1258
    %v1343 = vadd.f32 %v922, %v1258
    %v1344 = vadd.f32 %v925, %v1258
    %v1345 = vadd.f32 %v930, %v1258
    %v1346 = vadd.f32 %v933, %v1258
    %v1347 = vadd.f32 %v938, %v1262
    %v1348 = vadd.f32 %v941, %v1262
    %v1349 = vadd.f32 %v946, %v1262
    %v1350 = vadd.f32 %v949, %v1262
    %v1351 = vadd.f32 %v954, %v1262
    %v1352 = vadd.f32 %v957, %v1262
    %v1353 = vadd.f32 %v962, %v1262
    %v1354 = vadd.f32 %v965, %v1262
    %v1355 = vadd.f32 %v970, %v1262
    %v1356 = vadd.f32 %v973, %v1262
    %v1357 = vadd.f32 %v978, %v1262
    %v1358 = vadd.f32 %v981, %v1262
    %v1359 = vadd.f32 %v986, %v1262
    %v1360 = vadd.f32 %v989, %v1262
    %v1361 = vadd.f32 %v994, %v1262
    %v1362 = vadd.f32 %v997, %v1262
    %v1363 = vadd.f32 %v1002, %v1266
    %v1364 = vadd.f32 %v1005, %v1266
    %v1365 = vadd.f32 %v1010, %v1266
    %v1366 = vadd.f32 %v1013, %v1266
    %v1367 = vadd.f32 %v1018, %v1266
    %v1368 = vadd.f32 %v1021, %v1266
    %v1369 = vadd.f32 %v1026, %v1266
    %v1370 = vadd.f32 %v1029, %v1266
    %v1371 = vadd.f32 %v1034, %v1266
    %v1372 = vadd.f32 %v1037, %v1266
    %v1373 = vadd.f32 %v1042, %v1266
    %v1374 = vadd.f32 %v1045, %v1266
    %v1375 = vadd.f32 %v1050, %v1266
    %v1376 = vadd.f32 %v1053, %v1266
    %v1377 = vadd.f32 %v1058, %v1266
    %v1378 = vadd.f32 %v1061, %v1266
    %v1379 = vadd.f32 %v1066, %v1270
    %v1380 = vadd.f32 %v1069, %v1270
    %v1381 = vadd.f32 %v1074, %v1270
    %v1382 = vadd.f32 %v1077, %v1270
    %v1383 = vadd.f32 %v1082, %v1270
    %v1384 = vadd.f32 %v1085, %v1270
    %v1385 = vadd.f32 %v1090, %v1270
    %v1386 = vadd.f32 %v1093, %v1270
    %v1387 = vadd.f32 %v1098, %v1270
    %v1388 = vadd.f32 %v1101, %v1270
    %v1389 = vadd.f32 %v1106, %v1270
    %v1390 = vadd.f32 %v1109, %v1270
    %v1391 = vadd.f32 %v1114, %v1270
    %v1392 = vadd.f32 %v1117, %v1270
    %v1393 = vadd.f32 %v1122, %v1270
    %v1394 = vadd.f32 %v1125, %v1270
    %v1395 = vadd.f32 %v1130, %v1274
    %v1396 = vadd.f32 %v1133, %v1274
    %v1397 = vadd.f32 %v1138, %v1274
    %v1398 = vadd.f32 %v1141, %v1274
    %v1399 = vadd.f32 %v1146, %v1274
    %v1400 = vadd.f32 %v1149, %v1274
    %v1401 = vadd.f32 %v1154, %v1274
    %v1402 = vadd.f32 %v1157, %v1274
    %v1403 = vadd.f32 %v1162, %v1274
    %v1404 = vadd.f32 %v1165, %v1274
    %v1405 = vadd.f32 %v1170, %v1274
    %v1406 = vadd.f32 %v1173, %v1274
    %v1407 = vadd.f32 %v1178, %v1274
    %v1408 = vadd.f32 %v1181, %v1274
    %v1409 = vadd.f32 %v1186, %v1274
    %v1410 = vadd.f32 %v1189, %v1274
    %v1411 = vmax.f32 %v1283, 0.0
    %v1412 = vmax.f32 %v1284, 0.0
    %v1413 = vmax.f32 %v1285, 0.0
    %v1414 = vmax.f32 %v1286, 0.0
    %v1415 = vmax.f32 %v1287, 0.0
    %v1416 = vmax.f32 %v1288, 0.0
    %v1417 = vmax.f32 %v1289, 0.0
    %v1418 = vmax.f32 %v1290, 0.0
    %v1419 = vmax.f32 %v1291, 0.0
    %v1420 = vmax.f32 %v1292, 0.0
    %v1421 = vmax.f32 %v1293, 0.0
    %v1422 = vmax.f32 %v1294, 0.0
    %v1423 = vmax.f32 %v1295, 0.0
    %v1424 = vmax.f32 %v1296, 0.0
    %v1425 = vmax.f32 %v1297, 0.0
    %v1426 = vmax.f32 %v1298, 0.0
    %v1427 = vmax.f32 %v1299, 0.0
    %v1428 = vmax.f32 %v1300, 0.0
    %v1429 = vmax.f32 %v1301, 0.0
    %v1430 = vmax.f32 %v1302, 0.0
    %v1431 = vmax.f32 %v1303, 0.0
    %v1432 = vmax.f32 %v1304, 0.0
    %v1433 = vmax.f32 %v1305, 0.0
    %v1434 = vmax.f32 %v1306, 0.0
    %v1435 = vmax.f32 %v1307, 0.0
    %v1436 = vmax.f32 %v1308, 0.0
    %v1437 = vmax.f32 %v1309, 0.0
    %v1438 = vmax.f32 %v1310, 0.0
    %v1439 = vmax.f32 %v1311, 0.0
    %v1440 = vmax.f32 %v1312, 0.0
    %v1441 = vmax.f32 %v1313, 0.0
    %v1442 = vmax.f32 %v1314, 0.0
    %v1443 = vmax.f32 %v1315, 0.0
    %v1444 = vmax.f32 %v1316, 0.0
    %v1445 = vmax.f32 %v1317, 0.0
    %v1446 = vmax.f32 %v1318, 0.0
    %v1447 = vmax.f32 %v1319, 0.0
    %v1448 = vmax.f32 %v1320, 0.0
    %v1449 = vmax.f32 %v1321, 0.0
    %v1450 = vmax.f32 %v1322, 0.0
    %v1451 = vmax.f32 %v1323, 0.0
    %v1452 = vmax.f32 %v1324, 0.0
    %v1453 = vmax.f32 %v1325, 0.0
    %v1454 = vmax.f32 %v1326, 0.0
    %v1455 = vmax.f32 %v1327, 0.0
    %v1456 = vmax.f32 %v1328, 0.0
    %v1457 = vmax.f32 %v1329, 0.0
    %v1458 = vmax.f32 %v1330, 0.0
    %v1459 = vmax.f32 %v1331, 0.0
    %v1460 = vmax.f32 %v1332, 0.0
    %v1461 = vmax.f32 %v1333, 0.0
    %v1462 = vmax.f32 %v1334, 0.0
    %v1463 = vmax.f32 %v1335, 0.0
    %v1464 = vmax.f32 %v1336, 0.0
    %v1465 = vmax.f32 %v1337, 0.0
    %v1466 = vmax.f32 %v1338, 0.0
    %v1467 = vmax.f32 %v1339, 0.0
    %v1468 = vmax.f32 %v1340, 0.0
    %v1469 = vmax.f32 %v1341, 0.0
    %v1470 = vmax.f32 %v1342, 0.0
    %v1471 = vmax.f32 %v1343, 0.0
    %v1472 = vmax.f32 %v1344, 0.0
    %v1473 = vmax.f32 %v1345, 0.0
    %v1474 = vmax.f32 %v1346, 0.0
    %v1475 = vmax.f32 %v1347, 0.0
    %v1476 = vmax.f32 %v1348, 0.0
    %v1477 = vmax.f32 %v1349, 0.0
    %v1478 = vmax.f32 %v1350, 0.0
    %v1479 = vmax.f32 %v1351, 0.0
    %v1480 = vmax.f32 %v1352, 0.0
    %v1481 = vmax.f32 %v1353, 0.0
    %v1482 = vmax.f32 %v1354, 0.0
    %v1483 = vmax.f32 %v1355, 0.0
    %v1484 = vmax.f32 %v1356, 0.0
    %v1485 = vmax.f32 %v1357, 0.0
    %v1486 = vmax.f32 %v1358, 0.0
    %v1487 = vmax.f32 %v1359, 0.0
    %v1488 = vmax.f32 %v1360, 0.0
    %v1489 = vmax.f32 %v1361, 0.0
    %v1490 = vmax.f32 %v1362, 0.0
    %v1491 = vmax.f32 %v1363, 0.0
    %v1492 = vmax.f32 %v1364, 0.0
    %v1493 = vmax.f32 %v1365, 0.0
    %v1494 = vmax.f32 %v1366, 0.0
    %v1495 = vmax.f32 %v1367, 0.0
    %v1496 = vmax.f32 %v1368, 0.0
    %v1497 = vmax.f32 %v1369, 0.0
    %v1498 = vmax.f32 %v1370, 0.0
    %v1499 = vmax.f32 %v1371, 0.0
    %v1500 = vmax.f32 %v1372, 0.0
    %v1501 = vmax.f32 %v1373, 0.0
    %v1502 = vmax.f32 %v1374, 0.0
    %v1503 = vmax.f32 %v1375, 0.0
    %v1504 = vmax.f32 %v1376, 0.0
    %v1505 = vmax.f32 %v1377, 0.0
    %v1506 = vmax.f32 %v1378, 0.0
    %v1507 = vmax.f32 %v1379, 0.0
    %v1508 = vmax.f32 %v1380, 0.0
    %v1509 = vmax.f32 %v1381, 0.0
    %v1510 = vmax.f32 %v1382, 0.0
    %v1511 = vmax.f32 %v1383, 0.0
    %v1512 = vmax.f32 %v1384, 0.0
    %v1513 = vmax.f32 %v1385, 0.0
    %v1514 = vmax.f32 %v1386, 0.0
    %v1515 = vmax.f32 %v1387, 0.0
    %v1516 = vmax.f32 %v1388, 0.0
    %v1517 = vmax.f32 %v1389, 0.0
    %v1518 = vmax.f32 %v1390, 0.0
    %v1519 = vmax.f32 %v1391, 0.0
    %v1520 = vmax.f32 %v1392, 0.0
    %v1521 = vmax.f32 %v1393, 0.0
    %v1522 = vmax.f32 %v1394, 0.0
    %v1523 = vmax.f32 %v1395, 0.0
    %v1524 = vmax.f32 %v1396, 0.0
    %v1525 = vmax.f32 %v1397, 0.0
    %v1526 = vmax.f32 %v1398, 0.0
    %v1527 = vmax.f32 %v1399, 0.0
    %v1528 = vmax.f32 %v1400, 0.0
    %v1529 = vmax.f32 %v1401, 0.0
    %v1530 = vmax.f32 %v1402, 0.0
    %v1531 = vmax.f32 %v1403, 0.0
    %v1532 = vmax.f32 %v1404, 0.0
    %v1533 = vmax.f32 %v1405, 0.0
    %v1534 = vmax.f32 %v1406, 0.0
    %v1535 = vmax.f32 %v1407, 0.0
    %v1536 = vmax.f32 %v1408, 0.0
    %v1537 = vmax.f32 %v1409, 0.0
    %v1538 = vmax.f32 %v1410, 0.0
    %v1539 = vld [vmem:[%s4] sm:$0x1]
    %v1541 = vlaneseq
    %v1542 = vshrl.u32 %v1541, 7
    %v1543 = vsub.s32 0, %v1542
    %v1544 = vrot.slane %v1539, %v1543
    %v1546 = vmul.f32 %v1411, %v1544
    %v1547 = vmul.f32 %v1412, %v1544
    %v1548 = vmul.f32 %v1413, %v1544
    %v1549 = vmul.f32 %v1414, %v1544
    %v1550 = vmul.f32 %v1415, %v1544
    %v1551 = vmul.f32 %v1416, %v1544
    %v1552 = vmul.f32 %v1417, %v1544
    %v1553 = vmul.f32 %v1418, %v1544
    %v1554 = vmul.f32 %v1419, %v1544
    %v1555 = vmul.f32 %v1420, %v1544
    %v1556 = vmul.f32 %v1421, %v1544
    %v1557 = vmul.f32 %v1422, %v1544
    %v1558 = vmul.f32 %v1423, %v1544
    %v1559 = vmul.f32 %v1424, %v1544
    %v1560 = vmul.f32 %v1425, %v1544
    %v1561 = vmul.f32 %v1426, %v1544
    %v1562 = vmul.f32 %v1427, %v1544
    %v1563 = vmul.f32 %v1428, %v1544
    %v1564 = vmul.f32 %v1429, %v1544
    %v1565 = vmul.f32 %v1430, %v1544
    %v1566 = vmul.f32 %v1431, %v1544
    %v1567 = vmul.f32 %v1432, %v1544
    %v1568 = vmul.f32 %v1433, %v1544
    %v1569 = vmul.f32 %v1434, %v1544
    %v1570 = vmul.f32 %v1435, %v1544
    %v1571 = vmul.f32 %v1436, %v1544
    %v1572 = vmul.f32 %v1437, %v1544
    %v1573 = vmul.f32 %v1438, %v1544
    %v1574 = vmul.f32 %v1439, %v1544
    %v1575 = vmul.f32 %v1440, %v1544
    %v1576 = vmul.f32 %v1441, %v1544
    %v1577 = vmul.f32 %v1442, %v1544
    %v1578 = vmul.f32 %v1443, %v1544
    %v1579 = vmul.f32 %v1444, %v1544
    %v1580 = vmul.f32 %v1445, %v1544
    %v1581 = vmul.f32 %v1446, %v1544
    %v1582 = vmul.f32 %v1447, %v1544
    %v1583 = vmul.f32 %v1448, %v1544
    %v1584 = vmul.f32 %v1449, %v1544
    %v1585 = vmul.f32 %v1450, %v1544
    %v1586 = vmul.f32 %v1451, %v1544
    %v1587 = vmul.f32 %v1452, %v1544
    %v1588 = vmul.f32 %v1453, %v1544
    %v1589 = vmul.f32 %v1454, %v1544
    %v1590 = vmul.f32 %v1455, %v1544
    %v1591 = vmul.f32 %v1456, %v1544
    %v1592 = vmul.f32 %v1457, %v1544
    %v1593 = vmul.f32 %v1458, %v1544
    %v1594 = vmul.f32 %v1459, %v1544
    %v1595 = vmul.f32 %v1460, %v1544
    %v1596 = vmul.f32 %v1461, %v1544
    %v1597 = vmul.f32 %v1462, %v1544
    %v1598 = vmul.f32 %v1463, %v1544
    %v1599 = vmul.f32 %v1464, %v1544
    %v1600 = vmul.f32 %v1465, %v1544
    %v1601 = vmul.f32 %v1466, %v1544
    %v1602 = vmul.f32 %v1467, %v1544
    %v1603 = vmul.f32 %v1468, %v1544
    %v1604 = vmul.f32 %v1469, %v1544
    %v1605 = vmul.f32 %v1470, %v1544
    %v1606 = vmul.f32 %v1471, %v1544
    %v1607 = vmul.f32 %v1472, %v1544
    %v1608 = vmul.f32 %v1473, %v1544
    %v1609 = vmul.f32 %v1474, %v1544
    %v1610 = vmul.f32 %v1475, %v1544
    %v1611 = vmul.f32 %v1476, %v1544
    %v1612 = vmul.f32 %v1477, %v1544
    %v1613 = vmul.f32 %v1478, %v1544
    %v1614 = vmul.f32 %v1479, %v1544
    %v1615 = vmul.f32 %v1480, %v1544
    %v1616 = vmul.f32 %v1481, %v1544
    %v1617 = vmul.f32 %v1482, %v1544
    %v1618 = vmul.f32 %v1483, %v1544
    %v1619 = vmul.f32 %v1484, %v1544
    %v1620 = vmul.f32 %v1485, %v1544
    %v1621 = vmul.f32 %v1486, %v1544
    %v1622 = vmul.f32 %v1487, %v1544
    %v1623 = vmul.f32 %v1488, %v1544
    %v1624 = vmul.f32 %v1489, %v1544
    %v1625 = vmul.f32 %v1490, %v1544
    %v1626 = vmul.f32 %v1491, %v1544
    %v1627 = vmul.f32 %v1492, %v1544
    %v1628 = vmul.f32 %v1493, %v1544
    %v1629 = vmul.f32 %v1494, %v1544
    %v1630 = vmul.f32 %v1495, %v1544
    %v1631 = vmul.f32 %v1496, %v1544
    %v1632 = vmul.f32 %v1497, %v1544
    %v1633 = vmul.f32 %v1498, %v1544
    %v1634 = vmul.f32 %v1499, %v1544
    %v1635 = vmul.f32 %v1500, %v1544
    %v1636 = vmul.f32 %v1501, %v1544
    %v1637 = vmul.f32 %v1502, %v1544
    %v1638 = vmul.f32 %v1503, %v1544
    %v1639 = vmul.f32 %v1504, %v1544
    %v1640 = vmul.f32 %v1505, %v1544
    %v1641 = vmul.f32 %v1506, %v1544
    %v1642 = vmul.f32 %v1507, %v1544
    %v1643 = vmul.f32 %v1508, %v1544
    %v1644 = vmul.f32 %v1509, %v1544
    %v1645 = vmul.f32 %v1510, %v1544
    %v1646 = vmul.f32 %v1511, %v1544
    %v1647 = vmul.f32 %v1512, %v1544
    %v1648 = vmul.f32 %v1513, %v1544
    %v1649 = vmul.f32 %v1514, %v1544
    %v1650 = vmul.f32 %v1515, %v1544
    %v1651 = vmul.f32 %v1516, %v1544
    %v1652 = vmul.f32 %v1517, %v1544
    %v1653 = vmul.f32 %v1518, %v1544
    %v1654 = vmul.f32 %v1519, %v1544
    %v1655 = vmul.f32 %v1520, %v1544
    %v1656 = vmul.f32 %v1521, %v1544
    %v1657 = vmul.f32 %v1522, %v1544
    %v1658 = vmul.f32 %v1523, %v1544
    %v1659 = vmul.f32 %v1524, %v1544
    %v1660 = vmul.f32 %v1525, %v1544
    %v1661 = vmul.f32 %v1526, %v1544
    %v1662 = vmul.f32 %v1527, %v1544
    %v1663 = vmul.f32 %v1528, %v1544
    %v1664 = vmul.f32 %v1529, %v1544
    %v1665 = vmul.f32 %v1530, %v1544
    %v1666 = vmul.f32 %v1531, %v1544
    %v1667 = vmul.f32 %v1532, %v1544
    %v1668 = vmul.f32 %v1533, %v1544
    %v1669 = vmul.f32 %v1534, %v1544
    %v1670 = vmul.f32 %v1535, %v1544
    %v1671 = vmul.f32 %v1536, %v1544
    %v1672 = vmul.f32 %v1537, %v1544
    %v1673 = vmul.f32 %v1538, %v1544
    %1674 = vadd.xlane.f32.xlu0 %v1546
    %v1675 = vpop.xlane.xlu0 %1674
    %1676 = vadd.xlane.f32.xlu0 %v1547
    %v1677 = vpop.xlane.xlu0 %1676
    %1678 = vadd.xlane.f32.xlu0 %v1548
    %v1679 = vpop.xlane.xlu0 %1678
    %1680 = vadd.xlane.f32.xlu0 %v1549
    %v1681 = vpop.xlane.xlu0 %1680
    %1682 = vadd.xlane.f32.xlu0 %v1550
    %v1683 = vpop.xlane.xlu0 %1682
    %1684 = vadd.xlane.f32.xlu0 %v1551
    %v1685 = vpop.xlane.xlu0 %1684
    %1686 = vadd.xlane.f32.xlu0 %v1552
    %v1687 = vpop.xlane.xlu0 %1686
    %1688 = vadd.xlane.f32.xlu0 %v1553
    %v1689 = vpop.xlane.xlu0 %1688
    %1690 = vadd.xlane.f32.xlu0 %v1554
    %v1691 = vpop.xlane.xlu0 %1690
    %1692 = vadd.xlane.f32.xlu0 %v1555
    %v1693 = vpop.xlane.xlu0 %1692
    %1694 = vadd.xlane.f32.xlu0 %v1556
    %v1695 = vpop.xlane.xlu0 %1694
    %1696 = vadd.xlane.f32.xlu0 %v1557
    %v1697 = vpop.xlane.xlu0 %1696
    %1698 = vadd.xlane.f32.xlu0 %v1558
    %v1699 = vpop.xlane.xlu0 %1698
    %1700 = vadd.xlane.f32.xlu0 %v1559
    %v1701 = vpop.xlane.xlu0 %1700
    %1702 = vadd.xlane.f32.xlu0 %v1560
    %v1703 = vpop.xlane.xlu0 %1702
    %1704 = vadd.xlane.f32.xlu0 %v1561
    %v1705 = vpop.xlane.xlu0 %1704
    %1706 = vadd.xlane.f32.xlu0 %v1562
    %v1707 = vpop.xlane.xlu0 %1706
    %1708 = vadd.xlane.f32.xlu0 %v1563
    %v1709 = vpop.xlane.xlu0 %1708
    %1710 = vadd.xlane.f32.xlu0 %v1564
    %v1711 = vpop.xlane.xlu0 %1710
    %1712 = vadd.xlane.f32.xlu0 %v1565
    %v1713 = vpop.xlane.xlu0 %1712
    %1714 = vadd.xlane.f32.xlu0 %v1566
    %v1715 = vpop.xlane.xlu0 %1714
    %1716 = vadd.xlane.f32.xlu0 %v1567
    %v1717 = vpop.xlane.xlu0 %1716
    %1718 = vadd.xlane.f32.xlu0 %v1568
    %v1719 = vpop.xlane.xlu0 %1718
    %1720 = vadd.xlane.f32.xlu0 %v1569
    %v1721 = vpop.xlane.xlu0 %1720
    %1722 = vadd.xlane.f32.xlu0 %v1570
    %v1723 = vpop.xlane.xlu0 %1722
    %1724 = vadd.xlane.f32.xlu0 %v1571
    %v1725 = vpop.xlane.xlu0 %1724
    %1726 = vadd.xlane.f32.xlu0 %v1572
    %v1727 = vpop.xlane.xlu0 %1726
    %1728 = vadd.xlane.f32.xlu0 %v1573
    %v1729 = vpop.xlane.xlu0 %1728
    %1730 = vadd.xlane.f32.xlu0 %v1574
    %v1731 = vpop.xlane.xlu0 %1730
    %1732 = vadd.xlane.f32.xlu0 %v1575
    %v1733 = vpop.xlane.xlu0 %1732
    %1734 = vadd.xlane.f32.xlu0 %v1576
    %v1735 = vpop.xlane.xlu0 %1734
    %1736 = vadd.xlane.f32.xlu0 %v1577
    %v1737 = vpop.xlane.xlu0 %1736
    %1738 = vadd.xlane.f32.xlu0 %v1578
    %v1739 = vpop.xlane.xlu0 %1738
    %1740 = vadd.xlane.f32.xlu0 %v1579
    %v1741 = vpop.xlane.xlu0 %1740
    %1742 = vadd.xlane.f32.xlu0 %v1580
    %v1743 = vpop.xlane.xlu0 %1742
    %1744 = vadd.xlane.f32.xlu0 %v1581
    %v1745 = vpop.xlane.xlu0 %1744
    %1746 = vadd.xlane.f32.xlu0 %v1582
    %v1747 = vpop.xlane.xlu0 %1746
    %1748 = vadd.xlane.f32.xlu0 %v1583
    %v1749 = vpop.xlane.xlu0 %1748
    %1750 = vadd.xlane.f32.xlu0 %v1584
    %v1751 = vpop.xlane.xlu0 %1750
    %1752 = vadd.xlane.f32.xlu0 %v1585
    %v1753 = vpop.xlane.xlu0 %1752
    %1754 = vadd.xlane.f32.xlu0 %v1586
    %v1755 = vpop.xlane.xlu0 %1754
    %1756 = vadd.xlane.f32.xlu0 %v1587
    %v1757 = vpop.xlane.xlu0 %1756
    %1758 = vadd.xlane.f32.xlu0 %v1588
    %v1759 = vpop.xlane.xlu0 %1758
    %1760 = vadd.xlane.f32.xlu0 %v1589
    %v1761 = vpop.xlane.xlu0 %1760
    %1762 = vadd.xlane.f32.xlu0 %v1590
    %v1763 = vpop.xlane.xlu0 %1762
    %1764 = vadd.xlane.f32.xlu0 %v1591
    %v1765 = vpop.xlane.xlu0 %1764
    %1766 = vadd.xlane.f32.xlu0 %v1592
    %v1767 = vpop.xlane.xlu0 %1766
    %1768 = vadd.xlane.f32.xlu0 %v1593
    %v1769 = vpop.xlane.xlu0 %1768
    %1770 = vadd.xlane.f32.xlu0 %v1594
    %v1771 = vpop.xlane.xlu0 %1770
    %1772 = vadd.xlane.f32.xlu0 %v1595
    %v1773 = vpop.xlane.xlu0 %1772
    %1774 = vadd.xlane.f32.xlu0 %v1596
    %v1775 = vpop.xlane.xlu0 %1774
    %1776 = vadd.xlane.f32.xlu0 %v1597
    %v1777 = vpop.xlane.xlu0 %1776
    %1778 = vadd.xlane.f32.xlu0 %v1598
    %v1779 = vpop.xlane.xlu0 %1778
    %1780 = vadd.xlane.f32.xlu0 %v1599
    %v1781 = vpop.xlane.xlu0 %1780
    %1782 = vadd.xlane.f32.xlu0 %v1600
    %v1783 = vpop.xlane.xlu0 %1782
    %1784 = vadd.xlane.f32.xlu0 %v1601
    %v1785 = vpop.xlane.xlu0 %1784
    %1786 = vadd.xlane.f32.xlu0 %v1602
    %v1787 = vpop.xlane.xlu0 %1786
    %1788 = vadd.xlane.f32.xlu0 %v1603
    %v1789 = vpop.xlane.xlu0 %1788
    %1790 = vadd.xlane.f32.xlu0 %v1604
    %v1791 = vpop.xlane.xlu0 %1790
    %1792 = vadd.xlane.f32.xlu0 %v1605
    %v1793 = vpop.xlane.xlu0 %1792
    %1794 = vadd.xlane.f32.xlu0 %v1606
    %v1795 = vpop.xlane.xlu0 %1794
    %1796 = vadd.xlane.f32.xlu0 %v1607
    %v1797 = vpop.xlane.xlu0 %1796
    %1798 = vadd.xlane.f32.xlu0 %v1608
    %v1799 = vpop.xlane.xlu0 %1798
    %1800 = vadd.xlane.f32.xlu0 %v1609
    %v1801 = vpop.xlane.xlu0 %1800
    %1802 = vadd.xlane.f32.xlu0 %v1610
    %v1803 = vpop.xlane.xlu0 %1802
    %1804 = vadd.xlane.f32.xlu0 %v1611
    %v1805 = vpop.xlane.xlu0 %1804
    %1806 = vadd.xlane.f32.xlu0 %v1612
    %v1807 = vpop.xlane.xlu0 %1806
    %1808 = vadd.xlane.f32.xlu0 %v1613
    %v1809 = vpop.xlane.xlu0 %1808
    %1810 = vadd.xlane.f32.xlu0 %v1614
    %v1811 = vpop.xlane.xlu0 %1810
    %1812 = vadd.xlane.f32.xlu0 %v1615
    %v1813 = vpop.xlane.xlu0 %1812
    %1814 = vadd.xlane.f32.xlu0 %v1616
    %v1815 = vpop.xlane.xlu0 %1814
    %1816 = vadd.xlane.f32.xlu0 %v1617
    %v1817 = vpop.xlane.xlu0 %1816
    %1818 = vadd.xlane.f32.xlu0 %v1618
    %v1819 = vpop.xlane.xlu0 %1818
    %1820 = vadd.xlane.f32.xlu0 %v1619
    %v1821 = vpop.xlane.xlu0 %1820
    %1822 = vadd.xlane.f32.xlu0 %v1620
    %v1823 = vpop.xlane.xlu0 %1822
    %1824 = vadd.xlane.f32.xlu0 %v1621
    %v1825 = vpop.xlane.xlu0 %1824
    %1826 = vadd.xlane.f32.xlu0 %v1622
    %v1827 = vpop.xlane.xlu0 %1826
    %1828 = vadd.xlane.f32.xlu0 %v1623
    %v1829 = vpop.xlane.xlu0 %1828
    %1830 = vadd.xlane.f32.xlu0 %v1624
    %v1831 = vpop.xlane.xlu0 %1830
    %1832 = vadd.xlane.f32.xlu0 %v1625
    %v1833 = vpop.xlane.xlu0 %1832
    %1834 = vadd.xlane.f32.xlu0 %v1626
    %v1835 = vpop.xlane.xlu0 %1834
    %1836 = vadd.xlane.f32.xlu0 %v1627
    %v1837 = vpop.xlane.xlu0 %1836
    %1838 = vadd.xlane.f32.xlu0 %v1628
    %v1839 = vpop.xlane.xlu0 %1838
    %1840 = vadd.xlane.f32.xlu0 %v1629
    %v1841 = vpop.xlane.xlu0 %1840
    %1842 = vadd.xlane.f32.xlu0 %v1630
    %v1843 = vpop.xlane.xlu0 %1842
    %1844 = vadd.xlane.f32.xlu0 %v1631
    %v1845 = vpop.xlane.xlu0 %1844
    %1846 = vadd.xlane.f32.xlu0 %v1632
    %v1847 = vpop.xlane.xlu0 %1846
    %1848 = vadd.xlane.f32.xlu0 %v1633
    %v1849 = vpop.xlane.xlu0 %1848
    %1850 = vadd.xlane.f32.xlu0 %v1634
    %v1851 = vpop.xlane.xlu0 %1850
    %1852 = vadd.xlane.f32.xlu0 %v1635
    %v1853 = vpop.xlane.xlu0 %1852
    %1854 = vadd.xlane.f32.xlu0 %v1636
    %v1855 = vpop.xlane.xlu0 %1854
    %1856 = vadd.xlane.f32.xlu0 %v1637
    %v1857 = vpop.xlane.xlu0 %1856
    %1858 = vadd.xlane.f32.xlu0 %v1638
    %v1859 = vpop.xlane.xlu0 %1858
    %1860 = vadd.xlane.f32.xlu0 %v1639
    %v1861 = vpop.xlane.xlu0 %1860
    %1862 = vadd.xlane.f32.xlu0 %v1640
    %v1863 = vpop.xlane.xlu0 %1862
    %1864 = vadd.xlane.f32.xlu0 %v1641
    %v1865 = vpop.xlane.xlu0 %1864
    %1866 = vadd.xlane.f32.xlu0 %v1642
    %v1867 = vpop.xlane.xlu0 %1866
    %1868 = vadd.xlane.f32.xlu0 %v1643
    %v1869 = vpop.xlane.xlu0 %1868
    %1870 = vadd.xlane.f32.xlu0 %v1644
    %v1871 = vpop.xlane.xlu0 %1870
    %1872 = vadd.xlane.f32.xlu0 %v1645
    %v1873 = vpop.xlane.xlu0 %1872
    %1874 = vadd.xlane.f32.xlu0 %v1646
    %v1875 = vpop.xlane.xlu0 %1874
    %1876 = vadd.xlane.f32.xlu0 %v1647
    %v1877 = vpop.xlane.xlu0 %1876
    %1878 = vadd.xlane.f32.xlu0 %v1648
    %v1879 = vpop.xlane.xlu0 %1878
    %1880 = vadd.xlane.f32.xlu0 %v1649
    %v1881 = vpop.xlane.xlu0 %1880
    %1882 = vadd.xlane.f32.xlu0 %v1650
    %v1883 = vpop.xlane.xlu0 %1882
    %1884 = vadd.xlane.f32.xlu0 %v1651
    %v1885 = vpop.xlane.xlu0 %1884
    %1886 = vadd.xlane.f32.xlu0 %v1652
    %v1887 = vpop.xlane.xlu0 %1886
    %1888 = vadd.xlane.f32.xlu0 %v1653
    %v1889 = vpop.xlane.xlu0 %1888
    %1890 = vadd.xlane.f32.xlu0 %v1654
    %v1891 = vpop.xlane.xlu0 %1890
    %1892 = vadd.xlane.f32.xlu0 %v1655
    %v1893 = vpop.xlane.xlu0 %1892
    %1894 = vadd.xlane.f32.xlu0 %v1656
    %v1895 = vpop.xlane.xlu0 %1894
    %1896 = vadd.xlane.f32.xlu0 %v1657
    %v1897 = vpop.xlane.xlu0 %1896
    %1898 = vadd.xlane.f32.xlu0 %v1658
    %v1899 = vpop.xlane.xlu0 %1898
    %1900 = vadd.xlane.f32.xlu0 %v1659
    %v1901 = vpop.xlane.xlu0 %1900
    %1902 = vadd.xlane.f32.xlu0 %v1660
    %v1903 = vpop.xlane.xlu0 %1902
    %1904 = vadd.xlane.f32.xlu0 %v1661
    %v1905 = vpop.xlane.xlu0 %1904
    %1906 = vadd.xlane.f32.xlu0 %v1662
    %v1907 = vpop.xlane.xlu0 %1906
    %1908 = vadd.xlane.f32.xlu0 %v1663
    %v1909 = vpop.xlane.xlu0 %1908
    %1910 = vadd.xlane.f32.xlu0 %v1664
    %v1911 = vpop.xlane.xlu0 %1910
    %1912 = vadd.xlane.f32.xlu0 %v1665
    %v1913 = vpop.xlane.xlu0 %1912
    %1914 = vadd.xlane.f32.xlu0 %v1666
    %v1915 = vpop.xlane.xlu0 %1914
    %1916 = vadd.xlane.f32.xlu0 %v1667
    %v1917 = vpop.xlane.xlu0 %1916
    %1918 = vadd.xlane.f32.xlu0 %v1668
    %v1919 = vpop.xlane.xlu0 %1918
    %1920 = vadd.xlane.f32.xlu0 %v1669
    %v1921 = vpop.xlane.xlu0 %1920
    %1922 = vadd.xlane.f32.xlu0 %v1670
    %v1923 = vpop.xlane.xlu0 %1922
    %1924 = vadd.xlane.f32.xlu0 %v1671
    %v1925 = vpop.xlane.xlu0 %1924
    %1926 = vadd.xlane.f32.xlu0 %v1672
    %v1927 = vpop.xlane.xlu0 %1926
    %1928 = vadd.xlane.f32.xlu0 %v1673
    %v1929 = vpop.xlane.xlu0 %1928
    %v1930 = vlaneseq
    %v1931 = vand.u32 %v1930, 127
    %vm1932 = vcmp.lt.s32.totalorder %v1931, 16
    %v2061 = vlaneseq
    %v2062 = vshrl.u32 %v2061, 7
    %v2063 = vsub.s32 %v1931, %v2062
    %v2064 = vrot.slane %v1675, %v2063
    %v2065 = vadd.s32 %v1931, 4294967288
    %v2066 = vlaneseq
    %v2067 = vshrl.u32 %v2066, 7
    %v2068 = vsub.s32 %v2065, %v2067
    %v2069 = vrot.slane %v1677, %v2068
    %vm2070 = vcmask 130112
    %v2071 = vsel %vm2070, %v2069, %v2064
    %v2072 = vadd.s32 %v1931, 4294967280
    %v2073 = vlaneseq
    %v2074 = vshrl.u32 %v2073, 7
    %v2075 = vsub.s32 %v2072, %v2074
    %v2076 = vrot.slane %v1679, %v2075
    %vm2077 = vcmask 195712
    %v2078 = vsel %vm2077, %v2076, %v2071
    %v2079 = vadd.s32 %v1931, 4294967272
    %v2080 = vlaneseq
    %v2081 = vshrl.u32 %v2080, 7
    %v2082 = vsub.s32 %v2079, %v2081
    %v2083 = vrot.slane %v1681, %v2082
    %vm2084 = vcmask 261312
    %v2085 = vsel %vm2084, %v2083, %v2078
    %v2086 = vadd.s32 %v1931, 4294967264
    %v2087 = vlaneseq
    %v2088 = vshrl.u32 %v2087, 7
    %v2089 = vsub.s32 %v2086, %v2088
    %v2090 = vrot.slane %v1683, %v2089
    %vm2091 = vcmask 326912
    %v2092 = vsel %vm2091, %v2090, %v2085
    %v2093 = vadd.s32 %v1931, 4294967256
    %v2094 = vlaneseq
    %v2095 = vshrl.u32 %v2094, 7
    %v2096 = vsub.s32 %v2093, %v2095
    %v2097 = vrot.slane %v1685, %v2096
    %vm2098 = vcmask 392512
    %v2099 = vsel %vm2098, %v2097, %v2092
    %v2100 = vadd.s32 %v1931, 4294967248
    %v2101 = vlaneseq
    %v2102 = vshrl.u32 %v2101, 7
    %v2103 = vsub.s32 %v2100, %v2102
    %v2104 = vrot.slane %v1687, %v2103
    %vm2105 = vcmask 458112
    %v2106 = vsel %vm2105, %v2104, %v2099
    %v2107 = vadd.s32 %v1931, 4294967240
    %v2108 = vlaneseq
    %v2109 = vshrl.u32 %v2108, 7
    %v2110 = vsub.s32 %v2107, %v2109
    %v2111 = vrot.slane %v1689, %v2110
    %vm2112 = vcmask 523712
    %v2113 = vsel %vm2112, %v2111, %v2106
    %v2114 = vadd.s32 %v1931, 4294967232
    %v2115 = vlaneseq
    %v2116 = vshrl.u32 %v2115, 7
    %v2117 = vsub.s32 %v2114, %v2116
    %v2118 = vrot.slane %v1691, %v2117
    %vm2119 = vcmask 589312
    %v2120 = vsel %vm2119, %v2118, %v2113
    %v2121 = vadd.s32 %v1931, 4294967224
    %v2122 = vlaneseq
    %v2123 = vshrl.u32 %v2122, 7
    %v2124 = vsub.s32 %v2121, %v2123
    %v2125 = vrot.slane %v1693, %v2124
    %vm2126 = vcmask 654912
    %v2127 = vsel %vm2126, %v2125, %v2120
    %v2128 = vadd.s32 %v1931, 4294967216
    %v2129 = vlaneseq
    %v2130 = vshrl.u32 %v2129, 7
    %v2131 = vsub.s32 %v2128, %v2130
    %v2132 = vrot.slane %v1695, %v2131
    %vm2133 = vcmask 720512
    %v2134 = vsel %vm2133, %v2132, %v2127
    %v2135 = vadd.s32 %v1931, 4294967208
    %v2136 = vlaneseq
    %v2137 = vshrl.u32 %v2136, 7
    %v2138 = vsub.s32 %v2135, %v2137
    %v2139 = vrot.slane %v1697, %v2138
    %vm2140 = vcmask 786112
    %v2141 = vsel %vm2140, %v2139, %v2134
    %v2142 = vadd.s32 %v1931, 4294967200
    %v2143 = vlaneseq
    %v2144 = vshrl.u32 %v2143, 7
    %v2145 = vsub.s32 %v2142, %v2144
    %v2146 = vrot.slane %v1699, %v2145
    %vm2147 = vcmask 851712
    %v2148 = vsel %vm2147, %v2146, %v2141
    %v2149 = vadd.s32 %v1931, 4294967192
    %v2150 = vlaneseq
    %v2151 = vshrl.u32 %v2150, 7
    %v2152 = vsub.s32 %v2149, %v2151
    %v2153 = vrot.slane %v1701, %v2152
    %vm2154 = vcmask 917312
    %v2155 = vsel %vm2154, %v2153, %v2148
    %v2156 = vadd.s32 %v1931, 4294967184
    %v2157 = vlaneseq
    %v2158 = vshrl.u32 %v2157, 7
    %v2159 = vsub.s32 %v2156, %v2158
    %v2160 = vrot.slane %v1703, %v2159
    %vm2161 = vcmask 982912
    %v2162 = vsel %vm2161, %v2160, %v2155
    %v2163 = vadd.s32 %v1931, 4294967176
    %v2164 = vlaneseq
    %v2165 = vshrl.u32 %v2164, 7
    %v2166 = vsub.s32 %v2163, %v2165
    %v2167 = vrot.slane %v1705, %v2166
    %vm2168 = vcmask 1048512
    %v2169 = vsel %vm2168, %v2167, %v2162
    %v2170 = vlaneseq
    %v2171 = vshrl.u32 %v2170, 7
    %v2172 = vsub.s32 %v1931, %v2171
    %v2173 = vrot.slane %v1707, %v2172
    %v2174 = vlaneseq
    %v2175 = vshrl.u32 %v2174, 7
    %v2176 = vsub.s32 %v2065, %v2175
    %v2177 = vrot.slane %v1709, %v2176
    %v2178 = vsel %vm2070, %v2177, %v2173
    %v2179 = vlaneseq
    %v2180 = vshrl.u32 %v2179, 7
    %v2181 = vsub.s32 %v2072, %v2180
    %v2182 = vrot.slane %v1711, %v2181
    %v2183 = vsel %vm2077, %v2182, %v2178
    %v2184 = vlaneseq
    %v2185 = vshrl.u32 %v2184, 7
    %v2186 = vsub.s32 %v2079, %v2185
    %v2187 = vrot.slane %v1713, %v2186
    %v2188 = vsel %vm2084, %v2187, %v2183
    %v2189 = vlaneseq
    %v2190 = vshrl.u32 %v2189, 7
    %v2191 = vsub.s32 %v2086, %v2190
    %v2192 = vrot.slane %v1715, %v2191
    %v2193 = vsel %vm2091, %v2192, %v2188
    %v2194 = vlaneseq
    %v2195 = vshrl.u32 %v2194, 7
    %v2196 = vsub.s32 %v2093, %v2195
    %v2197 = vrot.slane %v1717, %v2196
    %v2198 = vsel %vm2098, %v2197, %v2193
    %v2199 = vlaneseq
    %v2200 = vshrl.u32 %v2199, 7
    %v2201 = vsub.s32 %v2100, %v2200
    %v2202 = vrot.slane %v1719, %v2201
    %v2203 = vsel %vm2105, %v2202, %v2198
    %v2204 = vlaneseq
    %v2205 = vshrl.u32 %v2204, 7
    %v2206 = vsub.s32 %v2107, %v2205
    %v2207 = vrot.slane %v1721, %v2206
    %v2208 = vsel %vm2112, %v2207, %v2203
    %v2209 = vlaneseq
    %v2210 = vshrl.u32 %v2209, 7
    %v2211 = vsub.s32 %v2114, %v2210
    %v2212 = vrot.slane %v1723, %v2211
    %v2213 = vsel %vm2119, %v2212, %v2208
    %v2214 = vlaneseq
    %v2215 = vshrl.u32 %v2214, 7
    %v2216 = vsub.s32 %v2121, %v2215
    %v2217 = vrot.slane %v1725, %v2216
    %v2218 = vsel %vm2126, %v2217, %v2213
    %v2219 = vlaneseq
    %v2220 = vshrl.u32 %v2219, 7
    %v2221 = vsub.s32 %v2128, %v2220
    %v2222 = vrot.slane %v1727, %v2221
    %v2223 = vsel %vm2133, %v2222, %v2218
    %v2224 = vlaneseq
    %v2225 = vshrl.u32 %v2224, 7
    %v2226 = vsub.s32 %v2135, %v2225
    %v2227 = vrot.slane %v1729, %v2226
    %v2228 = vsel %vm2140, %v2227, %v2223
    %v2229 = vlaneseq
    %v2230 = vshrl.u32 %v2229, 7
    %v2231 = vsub.s32 %v2142, %v2230
    %v2232 = vrot.slane %v1731, %v2231
    %v2233 = vsel %vm2147, %v2232, %v2228
    %v2234 = vlaneseq
    %v2235 = vshrl.u32 %v2234, 7
    %v2236 = vsub.s32 %v2149, %v2235
    %v2237 = vrot.slane %v1733, %v2236
    %v2238 = vsel %vm2154, %v2237, %v2233
    %v2239 = vlaneseq
    %v2240 = vshrl.u32 %v2239, 7
    %v2241 = vsub.s32 %v2156, %v2240
    %v2242 = vrot.slane %v1735, %v2241
    %v2243 = vsel %vm2161, %v2242, %v2238
    %v2244 = vlaneseq
    %v2245 = vshrl.u32 %v2244, 7
    %v2246 = vsub.s32 %v2163, %v2245
    %v2247 = vrot.slane %v1737, %v2246
    %v2248 = vsel %vm2168, %v2247, %v2243
    %v2249 = vlaneseq
    %v2250 = vshrl.u32 %v2249, 7
    %v2251 = vsub.s32 %v1931, %v2250
    %v2252 = vrot.slane %v1739, %v2251
    %v2253 = vlaneseq
    %v2254 = vshrl.u32 %v2253, 7
    %v2255 = vsub.s32 %v2065, %v2254
    %v2256 = vrot.slane %v1741, %v2255
    %v2257 = vsel %vm2070, %v2256, %v2252
    %v2258 = vlaneseq
    %v2259 = vshrl.u32 %v2258, 7
    %v2260 = vsub.s32 %v2072, %v2259
    %v2261 = vrot.slane %v1743, %v2260
    %v2262 = vsel %vm2077, %v2261, %v2257
    %v2263 = vlaneseq
    %v2264 = vshrl.u32 %v2263, 7
    %v2265 = vsub.s32 %v2079, %v2264
    %v2266 = vrot.slane %v1745, %v2265
    %v2267 = vsel %vm2084, %v2266, %v2262
    %v2268 = vlaneseq
    %v2269 = vshrl.u32 %v2268, 7
    %v2270 = vsub.s32 %v2086, %v2269
    %v2271 = vrot.slane %v1747, %v2270
    %v2272 = vsel %vm2091, %v2271, %v2267
    %v2273 = vlaneseq
    %v2274 = vshrl.u32 %v2273, 7
    %v2275 = vsub.s32 %v2093, %v2274
    %v2276 = vrot.slane %v1749, %v2275
    %v2277 = vsel %vm2098, %v2276, %v2272
    %v2278 = vlaneseq
    %v2279 = vshrl.u32 %v2278, 7
    %v2280 = vsub.s32 %v2100, %v2279
    %v2281 = vrot.slane %v1751, %v2280
    %v2282 = vsel %vm2105, %v2281, %v2277
    %v2283 = vlaneseq
    %v2284 = vshrl.u32 %v2283, 7
    %v2285 = vsub.s32 %v2107, %v2284
    %v2286 = vrot.slane %v1753, %v2285
    %v2287 = vsel %vm2112, %v2286, %v2282
    %v2288 = vlaneseq
    %v2289 = vshrl.u32 %v2288, 7
    %v2290 = vsub.s32 %v2114, %v2289
    %v2291 = vrot.slane %v1755, %v2290
    %v2292 = vsel %vm2119, %v2291, %v2287
    %v2293 = vlaneseq
    %v2294 = vshrl.u32 %v2293, 7
    %v2295 = vsub.s32 %v2121, %v2294
    %v2296 = vrot.slane %v1757, %v2295
    %v2297 = vsel %vm2126, %v2296, %v2292
    %v2298 = vlaneseq
    %v2299 = vshrl.u32 %v2298, 7
    %v2300 = vsub.s32 %v2128, %v2299
    %v2301 = vrot.slane %v1759, %v2300
    %v2302 = vsel %vm2133, %v2301, %v2297
    %v2303 = vlaneseq
    %v2304 = vshrl.u32 %v2303, 7
    %v2305 = vsub.s32 %v2135, %v2304
    %v2306 = vrot.slane %v1761, %v2305
    %v2307 = vsel %vm2140, %v2306, %v2302
    %v2308 = vlaneseq
    %v2309 = vshrl.u32 %v2308, 7
    %v2310 = vsub.s32 %v2142, %v2309
    %v2311 = vrot.slane %v1763, %v2310
    %v2312 = vsel %vm2147, %v2311, %v2307
    %v2313 = vlaneseq
    %v2314 = vshrl.u32 %v2313, 7
    %v2315 = vsub.s32 %v2149, %v2314
    %v2316 = vrot.slane %v1765, %v2315
    %v2317 = vsel %vm2154, %v2316, %v2312
    %v2318 = vlaneseq
    %v2319 = vshrl.u32 %v2318, 7
    %v2320 = vsub.s32 %v2156, %v2319
    %v2321 = vrot.slane %v1767, %v2320
    %v2322 = vsel %vm2161, %v2321, %v2317
    %v2323 = vlaneseq
    %v2324 = vshrl.u32 %v2323, 7
    %v2325 = vsub.s32 %v2163, %v2324
    %v2326 = vrot.slane %v1769, %v2325
    %v2327 = vsel %vm2168, %v2326, %v2322
    %v2328 = vlaneseq
    %v2329 = vshrl.u32 %v2328, 7
    %v2330 = vsub.s32 %v1931, %v2329
    %v2331 = vrot.slane %v1771, %v2330
    %v2332 = vlaneseq
    %v2333 = vshrl.u32 %v2332, 7
    %v2334 = vsub.s32 %v2065, %v2333
    %v2335 = vrot.slane %v1773, %v2334
    %v2336 = vsel %vm2070, %v2335, %v2331
    %v2337 = vlaneseq
    %v2338 = vshrl.u32 %v2337, 7
    %v2339 = vsub.s32 %v2072, %v2338
    %v2340 = vrot.slane %v1775, %v2339
    %v2341 = vsel %vm2077, %v2340, %v2336
    %v2342 = vlaneseq
    %v2343 = vshrl.u32 %v2342, 7
    %v2344 = vsub.s32 %v2079, %v2343
    %v2345 = vrot.slane %v1777, %v2344
    %v2346 = vsel %vm2084, %v2345, %v2341
    %v2347 = vlaneseq
    %v2348 = vshrl.u32 %v2347, 7
    %v2349 = vsub.s32 %v2086, %v2348
    %v2350 = vrot.slane %v1779, %v2349
    %v2351 = vsel %vm2091, %v2350, %v2346
    %v2352 = vlaneseq
    %v2353 = vshrl.u32 %v2352, 7
    %v2354 = vsub.s32 %v2093, %v2353
    %v2355 = vrot.slane %v1781, %v2354
    %v2356 = vsel %vm2098, %v2355, %v2351
    %v2357 = vlaneseq
    %v2358 = vshrl.u32 %v2357, 7
    %v2359 = vsub.s32 %v2100, %v2358
    %v2360 = vrot.slane %v1783, %v2359
    %v2361 = vsel %vm2105, %v2360, %v2356
    %v2362 = vlaneseq
    %v2363 = vshrl.u32 %v2362, 7
    %v2364 = vsub.s32 %v2107, %v2363
    %v2365 = vrot.slane %v1785, %v2364
    %v2366 = vsel %vm2112, %v2365, %v2361
    %v2367 = vlaneseq
    %v2368 = vshrl.u32 %v2367, 7
    %v2369 = vsub.s32 %v2114, %v2368
    %v2370 = vrot.slane %v1787, %v2369
    %v2371 = vsel %vm2119, %v2370, %v2366
    %v2372 = vlaneseq
    %v2373 = vshrl.u32 %v2372, 7
    %v2374 = vsub.s32 %v2121, %v2373
    %v2375 = vrot.slane %v1789, %v2374
    %v2376 = vsel %vm2126, %v2375, %v2371
    %v2377 = vlaneseq
    %v2378 = vshrl.u32 %v2377, 7
    %v2379 = vsub.s32 %v2128, %v2378
    %v2380 = vrot.slane %v1791, %v2379
    %v2381 = vsel %vm2133, %v2380, %v2376
    %v2382 = vlaneseq
    %v2383 = vshrl.u32 %v2382, 7
    %v2384 = vsub.s32 %v2135, %v2383
    %v2385 = vrot.slane %v1793, %v2384
    %v2386 = vsel %vm2140, %v2385, %v2381
    %v2387 = vlaneseq
    %v2388 = vshrl.u32 %v2387, 7
    %v2389 = vsub.s32 %v2142, %v2388
    %v2390 = vrot.slane %v1795, %v2389
    %v2391 = vsel %vm2147, %v2390, %v2386
    %v2392 = vlaneseq
    %v2393 = vshrl.u32 %v2392, 7
    %v2394 = vsub.s32 %v2149, %v2393
    %v2395 = vrot.slane %v1797, %v2394
    %v2396 = vsel %vm2154, %v2395, %v2391
    %v2397 = vlaneseq
    %v2398 = vshrl.u32 %v2397, 7
    %v2399 = vsub.s32 %v2156, %v2398
    %v2400 = vrot.slane %v1799, %v2399
    %v2401 = vsel %vm2161, %v2400, %v2396
    %v2402 = vlaneseq
    %v2403 = vshrl.u32 %v2402, 7
    %v2404 = vsub.s32 %v2163, %v2403
    %v2405 = vrot.slane %v1801, %v2404
    %v2406 = vsel %vm2168, %v2405, %v2401
    %v2407 = vlaneseq
    %v2408 = vshrl.u32 %v2407, 7
    %v2409 = vsub.s32 %v1931, %v2408
    %v2410 = vrot.slane %v1803, %v2409
    %v2411 = vlaneseq
    %v2412 = vshrl.u32 %v2411, 7
    %v2413 = vsub.s32 %v2065, %v2412
    %v2414 = vrot.slane %v1805, %v2413
    %v2415 = vsel %vm2070, %v2414, %v2410
    %v2416 = vlaneseq
    %v2417 = vshrl.u32 %v2416, 7
    %v2418 = vsub.s32 %v2072, %v2417
    %v2419 = vrot.slane %v1807, %v2418
    %v2420 = vsel %vm2077, %v2419, %v2415
    %v2421 = vlaneseq
    %v2422 = vshrl.u32 %v2421, 7
    %v2423 = vsub.s32 %v2079, %v2422
    %v2424 = vrot.slane %v1809, %v2423
    %v2425 = vsel %vm2084, %v2424, %v2420
    %v2426 = vlaneseq
    %v2427 = vshrl.u32 %v2426, 7
    %v2428 = vsub.s32 %v2086, %v2427
    %v2429 = vrot.slane %v1811, %v2428
    %v2430 = vsel %vm2091, %v2429, %v2425
    %v2431 = vlaneseq
    %v2432 = vshrl.u32 %v2431, 7
    %v2433 = vsub.s32 %v2093, %v2432
    %v2434 = vrot.slane %v1813, %v2433
    %v2435 = vsel %vm2098, %v2434, %v2430
    %v2436 = vlaneseq
    %v2437 = vshrl.u32 %v2436, 7
    %v2438 = vsub.s32 %v2100, %v2437
    %v2439 = vrot.slane %v1815, %v2438
    %v2440 = vsel %vm2105, %v2439, %v2435
    %v2441 = vlaneseq
    %v2442 = vshrl.u32 %v2441, 7
    %v2443 = vsub.s32 %v2107, %v2442
    %v2444 = vrot.slane %v1817, %v2443
    %v2445 = vsel %vm2112, %v2444, %v2440
    %v2446 = vlaneseq
    %v2447 = vshrl.u32 %v2446, 7
    %v2448 = vsub.s32 %v2114, %v2447
    %v2449 = vrot.slane %v1819, %v2448
    %v2450 = vsel %vm2119, %v2449, %v2445
    %v2451 = vlaneseq
    %v2452 = vshrl.u32 %v2451, 7
    %v2453 = vsub.s32 %v2121, %v2452
    %v2454 = vrot.slane %v1821, %v2453
    %v2455 = vsel %vm2126, %v2454, %v2450
    %v2456 = vlaneseq
    %v2457 = vshrl.u32 %v2456, 7
    %v2458 = vsub.s32 %v2128, %v2457
    %v2459 = vrot.slane %v1823, %v2458
    %v2460 = vsel %vm2133, %v2459, %v2455
    %v2461 = vlaneseq
    %v2462 = vshrl.u32 %v2461, 7
    %v2463 = vsub.s32 %v2135, %v2462
    %v2464 = vrot.slane %v1825, %v2463
    %v2465 = vsel %vm2140, %v2464, %v2460
    %v2466 = vlaneseq
    %v2467 = vshrl.u32 %v2466, 7
    %v2468 = vsub.s32 %v2142, %v2467
    %v2469 = vrot.slane %v1827, %v2468
    %v2470 = vsel %vm2147, %v2469, %v2465
    %v2471 = vlaneseq
    %v2472 = vshrl.u32 %v2471, 7
    %v2473 = vsub.s32 %v2149, %v2472
    %v2474 = vrot.slane %v1829, %v2473
    %v2475 = vsel %vm2154, %v2474, %v2470
    %v2476 = vlaneseq
    %v2477 = vshrl.u32 %v2476, 7
    %v2478 = vsub.s32 %v2156, %v2477
    %v2479 = vrot.slane %v1831, %v2478
    %v2480 = vsel %vm2161, %v2479, %v2475
    %v2481 = vlaneseq
    %v2482 = vshrl.u32 %v2481, 7
    %v2483 = vsub.s32 %v2163, %v2482
    %v2484 = vrot.slane %v1833, %v2483
    %v2485 = vsel %vm2168, %v2484, %v2480
    %v2486 = vlaneseq
    %v2487 = vshrl.u32 %v2486, 7
    %v2488 = vsub.s32 %v1931, %v2487
    %v2489 = vrot.slane %v1835, %v2488
    %v2490 = vlaneseq
    %v2491 = vshrl.u32 %v2490, 7
    %v2492 = vsub.s32 %v2065, %v2491
    %v2493 = vrot.slane %v1837, %v2492
    %v2494 = vsel %vm2070, %v2493, %v2489
    %v2495 = vlaneseq
    %v2496 = vshrl.u32 %v2495, 7
    %v2497 = vsub.s32 %v2072, %v2496
    %v2498 = vrot.slane %v1839, %v2497
    %v2499 = vsel %vm2077, %v2498, %v2494
    %v2500 = vlaneseq
    %v2501 = vshrl.u32 %v2500, 7
    %v2502 = vsub.s32 %v2079, %v2501
    %v2503 = vrot.slane %v1841, %v2502
    %v2504 = vsel %vm2084, %v2503, %v2499
    %v2505 = vlaneseq
    %v2506 = vshrl.u32 %v2505, 7
    %v2507 = vsub.s32 %v2086, %v2506
    %v2508 = vrot.slane %v1843, %v2507
    %v2509 = vsel %vm2091, %v2508, %v2504
    %v2510 = vlaneseq
    %v2511 = vshrl.u32 %v2510, 7
    %v2512 = vsub.s32 %v2093, %v2511
    %v2513 = vrot.slane %v1845, %v2512
    %v2514 = vsel %vm2098, %v2513, %v2509
    %v2515 = vlaneseq
    %v2516 = vshrl.u32 %v2515, 7
    %v2517 = vsub.s32 %v2100, %v2516
    %v2518 = vrot.slane %v1847, %v2517
    %v2519 = vsel %vm2105, %v2518, %v2514
    %v2520 = vlaneseq
    %v2521 = vshrl.u32 %v2520, 7
    %v2522 = vsub.s32 %v2107, %v2521
    %v2523 = vrot.slane %v1849, %v2522
    %v2524 = vsel %vm2112, %v2523, %v2519
    %v2525 = vlaneseq
    %v2526 = vshrl.u32 %v2525, 7
    %v2527 = vsub.s32 %v2114, %v2526
    %v2528 = vrot.slane %v1851, %v2527
    %v2529 = vsel %vm2119, %v2528, %v2524
    %v2530 = vlaneseq
    %v2531 = vshrl.u32 %v2530, 7
    %v2532 = vsub.s32 %v2121, %v2531
    %v2533 = vrot.slane %v1853, %v2532
    %v2534 = vsel %vm2126, %v2533, %v2529
    %v2535 = vlaneseq
    %v2536 = vshrl.u32 %v2535, 7
    %v2537 = vsub.s32 %v2128, %v2536
    %v2538 = vrot.slane %v1855, %v2537
    %v2539 = vsel %vm2133, %v2538, %v2534
    %v2540 = vlaneseq
    %v2541 = vshrl.u32 %v2540, 7
    %v2542 = vsub.s32 %v2135, %v2541
    %v2543 = vrot.slane %v1857, %v2542
    %v2544 = vsel %vm2140, %v2543, %v2539
    %v2545 = vlaneseq
    %v2546 = vshrl.u32 %v2545, 7
    %v2547 = vsub.s32 %v2142, %v2546
    %v2548 = vrot.slane %v1859, %v2547
    %v2549 = vsel %vm2147, %v2548, %v2544
    %v2550 = vlaneseq
    %v2551 = vshrl.u32 %v2550, 7
    %v2552 = vsub.s32 %v2149, %v2551
    %v2553 = vrot.slane %v1861, %v2552
    %v2554 = vsel %vm2154, %v2553, %v2549
    %v2555 = vlaneseq
    %v2556 = vshrl.u32 %v2555, 7
    %v2557 = vsub.s32 %v2156, %v2556
    %v2558 = vrot.slane %v1863, %v2557
    %v2559 = vsel %vm2161, %v2558, %v2554
    %v2560 = vlaneseq
    %v2561 = vshrl.u32 %v2560, 7
    %v2562 = vsub.s32 %v2163, %v2561
    %v2563 = vrot.slane %v1865, %v2562
    %v2564 = vsel %vm2168, %v2563, %v2559
    %v2565 = vlaneseq
    %v2566 = vshrl.u32 %v2565, 7
    %v2567 = vsub.s32 %v1931, %v2566
    %v2568 = vrot.slane %v1867, %v2567
    %v2569 = vlaneseq
    %v2570 = vshrl.u32 %v2569, 7
    %v2571 = vsub.s32 %v2065, %v2570
    %v2572 = vrot.slane %v1869, %v2571
    %v2573 = vsel %vm2070, %v2572, %v2568
    %v2574 = vlaneseq
    %v2575 = vshrl.u32 %v2574, 7
    %v2576 = vsub.s32 %v2072, %v2575
    %v2577 = vrot.slane %v1871, %v2576
    %v2578 = vsel %vm2077, %v2577, %v2573
    %v2579 = vlaneseq
    %v2580 = vshrl.u32 %v2579, 7
    %v2581 = vsub.s32 %v2079, %v2580
    %v2582 = vrot.slane %v1873, %v2581
    %v2583 = vsel %vm2084, %v2582, %v2578
    %v2584 = vlaneseq
    %v2585 = vshrl.u32 %v2584, 7
    %v2586 = vsub.s32 %v2086, %v2585
    %v2587 = vrot.slane %v1875, %v2586
    %v2588 = vsel %vm2091, %v2587, %v2583
    %v2589 = vlaneseq
    %v2590 = vshrl.u32 %v2589, 7
    %v2591 = vsub.s32 %v2093, %v2590
    %v2592 = vrot.slane %v1877, %v2591
    %v2593 = vsel %vm2098, %v2592, %v2588
    %v2594 = vlaneseq
    %v2595 = vshrl.u32 %v2594, 7
    %v2596 = vsub.s32 %v2100, %v2595
    %v2597 = vrot.slane %v1879, %v2596
    %v2598 = vsel %vm2105, %v2597, %v2593
    %v2599 = vlaneseq
    %v2600 = vshrl.u32 %v2599, 7
    %v2601 = vsub.s32 %v2107, %v2600
    %v2602 = vrot.slane %v1881, %v2601
    %v2603 = vsel %vm2112, %v2602, %v2598
    %v2604 = vlaneseq
    %v2605 = vshrl.u32 %v2604, 7
    %v2606 = vsub.s32 %v2114, %v2605
    %v2607 = vrot.slane %v1883, %v2606
    %v2608 = vsel %vm2119, %v2607, %v2603
    %v2609 = vlaneseq
    %v2610 = vshrl.u32 %v2609, 7
    %v2611 = vsub.s32 %v2121, %v2610
    %v2612 = vrot.slane %v1885, %v2611
    %v2613 = vsel %vm2126, %v2612, %v2608
    %v2614 = vlaneseq
    %v2615 = vshrl.u32 %v2614, 7
    %v2616 = vsub.s32 %v2128, %v2615
    %v2617 = vrot.slane %v1887, %v2616
    %v2618 = vsel %vm2133, %v2617, %v2613
    %v2619 = vlaneseq
    %v2620 = vshrl.u32 %v2619, 7
    %v2621 = vsub.s32 %v2135, %v2620
    %v2622 = vrot.slane %v1889, %v2621
    %v2623 = vsel %vm2140, %v2622, %v2618
    %v2624 = vlaneseq
    %v2625 = vshrl.u32 %v2624, 7
    %v2626 = vsub.s32 %v2142, %v2625
    %v2627 = vrot.slane %v1891, %v2626
    %v2628 = vsel %vm2147, %v2627, %v2623
    %v2629 = vlaneseq
    %v2630 = vshrl.u32 %v2629, 7
    %v2631 = vsub.s32 %v2149, %v2630
    %v2632 = vrot.slane %v1893, %v2631
    %v2633 = vsel %vm2154, %v2632, %v2628
    %v2634 = vlaneseq
    %v2635 = vshrl.u32 %v2634, 7
    %v2636 = vsub.s32 %v2156, %v2635
    %v2637 = vrot.slane %v1895, %v2636
    %v2638 = vsel %vm2161, %v2637, %v2633
    %v2639 = vlaneseq
    %v2640 = vshrl.u32 %v2639, 7
    %v2641 = vsub.s32 %v2163, %v2640
    %v2642 = vrot.slane %v1897, %v2641
    %v2643 = vsel %vm2168, %v2642, %v2638
    %v2644 = vlaneseq
    %v2645 = vshrl.u32 %v2644, 7
    %v2646 = vsub.s32 %v1931, %v2645
    %v2647 = vrot.slane %v1899, %v2646
    %v2648 = vlaneseq
    %v2649 = vshrl.u32 %v2648, 7
    %v2650 = vsub.s32 %v2065, %v2649
    %v2651 = vrot.slane %v1901, %v2650
    %v2652 = vsel %vm2070, %v2651, %v2647
    %v2653 = vlaneseq
    %v2654 = vshrl.u32 %v2653, 7
    %v2655 = vsub.s32 %v2072, %v2654
    %v2656 = vrot.slane %v1903, %v2655
    %v2657 = vsel %vm2077, %v2656, %v2652
    %v2658 = vlaneseq
    %v2659 = vshrl.u32 %v2658, 7
    %v2660 = vsub.s32 %v2079, %v2659
    %v2661 = vrot.slane %v1905, %v2660
    %v2662 = vsel %vm2084, %v2661, %v2657
    %v2663 = vlaneseq
    %v2664 = vshrl.u32 %v2663, 7
    %v2665 = vsub.s32 %v2086, %v2664
    %v2666 = vrot.slane %v1907, %v2665
    %v2667 = vsel %vm2091, %v2666, %v2662
    %v2668 = vlaneseq
    %v2669 = vshrl.u32 %v2668, 7
    %v2670 = vsub.s32 %v2093, %v2669
    %v2671 = vrot.slane %v1909, %v2670
    %v2672 = vsel %vm2098, %v2671, %v2667
    %v2673 = vlaneseq
    %v2674 = vshrl.u32 %v2673, 7
    %v2675 = vsub.s32 %v2100, %v2674
    %v2676 = vrot.slane %v1911, %v2675
    %v2677 = vsel %vm2105, %v2676, %v2672
    %v2678 = vlaneseq
    %v2679 = vshrl.u32 %v2678, 7
    %v2680 = vsub.s32 %v2107, %v2679
    %v2681 = vrot.slane %v1913, %v2680
    %v2682 = vsel %vm2112, %v2681, %v2677
    %v2683 = vlaneseq
    %v2684 = vshrl.u32 %v2683, 7
    %v2685 = vsub.s32 %v2114, %v2684
    %v2686 = vrot.slane %v1915, %v2685
    %v2687 = vsel %vm2119, %v2686, %v2682
    %v2688 = vlaneseq
    %v2689 = vshrl.u32 %v2688, 7
    %v2690 = vsub.s32 %v2121, %v2689
    %v2691 = vrot.slane %v1917, %v2690
    %v2692 = vsel %vm2126, %v2691, %v2687
    %v2693 = vlaneseq
    %v2694 = vshrl.u32 %v2693, 7
    %v2695 = vsub.s32 %v2128, %v2694
    %v2696 = vrot.slane %v1919, %v2695
    %v2697 = vsel %vm2133, %v2696, %v2692
    %v2698 = vlaneseq
    %v2699 = vshrl.u32 %v2698, 7
    %v2700 = vsub.s32 %v2135, %v2699
    %v2701 = vrot.slane %v1921, %v2700
    %v2702 = vsel %vm2140, %v2701, %v2697
    %v2703 = vlaneseq
    %v2704 = vshrl.u32 %v2703, 7
    %v2705 = vsub.s32 %v2142, %v2704
    %v2706 = vrot.slane %v1923, %v2705
    %v2707 = vsel %vm2147, %v2706, %v2702
    %v2708 = vlaneseq
    %v2709 = vshrl.u32 %v2708, 7
    %v2710 = vsub.s32 %v2149, %v2709
    %v2711 = vrot.slane %v1925, %v2710
    %v2712 = vsel %vm2154, %v2711, %v2707
    %v2713 = vlaneseq
    %v2714 = vshrl.u32 %v2713, 7
    %v2715 = vsub.s32 %v2156, %v2714
    %v2716 = vrot.slane %v1927, %v2715
    %v2717 = vsel %vm2161, %v2716, %v2712
    %v2718 = vlaneseq
    %v2719 = vshrl.u32 %v2718, 7
    %v2720 = vsub.s32 %v2163, %v2719
    %v2721 = vrot.slane %v1929, %v2720
    %v2722 = vsel %vm2168, %v2721, %v2717
    %vm2723 = vcmask 1041409
    %v2724 = vsel %vm2723, %v2248, %v2169
    %vm2725 = vcmask 1042434
    %v2726 = vsel %vm2725, %v2327, %v2724
    %vm2727 = vcmask 1043459
    %v2728 = vsel %vm2727, %v2406, %v2726
    %vm2729 = vcmask 1044484
    %v2730 = vsel %vm2729, %v2485, %v2728
    %vm2731 = vcmask 1045509
    %v2732 = vsel %vm2731, %v2564, %v2730
    %vm2733 = vcmask 1046534
    %v2734 = vsel %vm2733, %v2643, %v2732
    %vm2735 = vcmask 1047559
    %v2736 = vsel %vm2735, %v2722, %v2734
    %v2738 = vsel %vm1932, %v2736, -inf
    %2739 = vmax.xlane.f32.xlu0 %v2738
    %v2740 = vpop.xlane.xlu0 %2739
    %v2741 = vsub.f32 %v2738, %v2740
    %v2742 = vmul.f32 %v2741, 1.442695
    %v2743 = vpow.pop %v2742
    %2744 = vadd.xlane.f32.xlu0 %v2743
    %v2745 = vpop.xlane.xlu0 %2744
    %v2746 = vrcp.pop %v2745
    %v2747 = vmul.f32 %v2743, %v2746
    %v2749 = vcombine.high %v2747, %v2747
    %v2751 = vunpack.c.l.s4 1966171168
    %v2752 = vunpack.c.0.s8 %v2751
    %v2753 = vlaneseq
    %v2754 = vshrl.u32 %v2753, 7
    %v2755 = vsub.s32 %v2752, %v2754
    %v2756 = vrot.slane %v2747, %v2755
    %v2758 = vunpack.c.l.s4 1966171168
    %v2759 = vunpack.c.0.s8 %v2758
    %v2760 = vlaneseq
    %v2761 = vshrl.u32 %v2760, 7
    %v2762 = vsub.s32 %v2759, %v2761
    %v2763 = vrot.slane %v2749, %v2762
    %v2764 = vcombine.high %v2756, %v2756
    %v2765 = vcombine.high %v2763, %v2763
    %v2767 = vunpack.c.l.s4 1966171168
    %v2768 = vunpack.c.0.s8 %v2767
    %v2769 = vlaneseq
    %v2770 = vshrl.u32 %v2769, 7
    %v2771 = vsub.s32 %v2768, %v2770
    %v2772 = vrot.slane %v2756, %v2771
    %v2774 = vunpack.c.l.s4 1966171168
    %v2775 = vunpack.c.0.s8 %v2774
    %v2776 = vlaneseq
    %v2777 = vshrl.u32 %v2776, 7
    %v2778 = vsub.s32 %v2775, %v2777
    %v2779 = vrot.slane %v2763, %v2778
    %v2781 = vunpack.c.l.s4 1966171168
    %v2782 = vunpack.c.0.s8 %v2781
    %v2783 = vlaneseq
    %v2784 = vshrl.u32 %v2783, 7
    %v2785 = vsub.s32 %v2782, %v2784
    %v2786 = vrot.slane %v2764, %v2785
    %v2788 = vunpack.c.l.s4 1966171168
    %v2789 = vunpack.c.0.s8 %v2788
    %v2790 = vlaneseq
    %v2791 = vshrl.u32 %v2790, 7
    %v2792 = vsub.s32 %v2789, %v2791
    %v2793 = vrot.slane %v2765, %v2792
    %v2794 = vcombine.high %v2772, %v2772
    %v2795 = vcombine.high %v2779, %v2779
    %v2796 = vcombine.high %v2786, %v2786
    %v2797 = vcombine.high %v2793, %v2793
    %v2806 = vpack.c.bf16 %v2772, %v2772
    %v2807 = vpack.c.bf16 %v2786, %v2786
    %v2808 = vpack.c.bf16 %v2794, %v2794
    %v2809 = vpack.c.bf16 %v2796, %v2796
    %v2810 = vpack.c.bf16 %v2779, %v2779
    %v2811 = vpack.c.bf16 %v2793, %v2793
    %v2812 = vpack.c.bf16 %v2795, %v2795
    %v2813 = vpack.c.bf16 %v2797, %v2797
    %2814 = vmatprep.subr.bf16.mxu0 0
    %2815 = vmatpush1.bf16.msra.mxu0 %v471
    %2816 = vmatprep.subr.bf16.mxu0 0
    %2817 = vmatpush1.bf16.msra.mxu0 %v472
    %2818 = vmatprep.subr.bf16.mxu0 0
    %2819 = vmatpush1.bf16.msra.mxu0 %v473
    %2820 = vmatprep.subr.bf16.mxu0 0
    %2821 = vmatpush1.bf16.msra.mxu0 %v474
    %2822 = vmatprep.subr.bf16.mxu0 0
    %2823 = vmatpush1.bf16.msra.mxu0 %v475
    %2824 = vmatprep.subr.bf16.mxu0 0
    %2825 = vmatpush1.bf16.msra.mxu0 %v476
    %2826 = vmatprep.subr.bf16.mxu0 0
    %2827 = vmatpush1.bf16.msra.mxu0 %v477
    %2828 = vmatprep.subr.bf16.mxu0 0
    %2829 = vmatpush1.bf16.msra.mxu0 %v478
    %2830 = vmatprep.subr.bf16.mxu0 0
    %2831 = vmatpush1.bf16.msra.mxu0 0
    %2832 = vmatprep.subr.bf16.mxu0 0
    %2833 = vmatpush1.bf16.msra.mxu0 0
    %2834 = vmatprep.subr.bf16.mxu0 0
    %2835 = vmatpush1.bf16.msra.mxu0 0
    %2836 = vmatprep.subr.bf16.mxu0 0
    %2837 = vmatpush1.bf16.msra.mxu0 0
    %2838 = vmatprep.subr.bf16.mxu0 0
    %2839 = vmatpush1.bf16.msra.mxu0 0
    %2840 = vmatprep.subr.bf16.mxu0 0
    %2841 = vmatpush1.bf16.msra.mxu0 0
    %2842 = vmatprep.subr.bf16.mxu0 0
    %2843 = vmatpush1.bf16.msra.mxu0 0
    %2844 = vmatprep.subr.bf16.mxu0 0
    %2845 = vmatpush1.bf16.msra.mxu0 0
    %2846 = vmatprep.mubr.bf16.mxu0 0
    %2847 = vmatmul.mubr.bf16.gmra.mrb[0].mxu0 %v2806
    %v2848 = vpop.f32.mrb[0].mxu0
    %v2849 = vadd.f32 0.0, %v2848
    %v2850 = vpop.f32.mrb[0].mxu0
    %v2851 = vpop.f32.mrb[0].mxu0
    %v2852 = vpop.f32.mrb[0].mxu0
    %2853 = vdwg.mxu0
    %2854 = vmatprep.subr.bf16.mxu0 0
    %2855 = vmatpush1.bf16.msra.mxu0 %v479
    %2856 = vmatprep.subr.bf16.mxu0 0
    %2857 = vmatpush1.bf16.msra.mxu0 %v480
    %2858 = vmatprep.subr.bf16.mxu0 0
    %2859 = vmatpush1.bf16.msra.mxu0 %v481
    %2860 = vmatprep.subr.bf16.mxu0 0
    %2861 = vmatpush1.bf16.msra.mxu0 %v482
    %2862 = vmatprep.subr.bf16.mxu0 0
    %2863 = vmatpush1.bf16.msra.mxu0 %v483
    %2864 = vmatprep.subr.bf16.mxu0 0
    %2865 = vmatpush1.bf16.msra.mxu0 %v484
    %2866 = vmatprep.subr.bf16.mxu0 0
    %2867 = vmatpush1.bf16.msra.mxu0 %v485
    %2868 = vmatprep.subr.bf16.mxu0 0
    %2869 = vmatpush1.bf16.msra.mxu0 %v486
    %2870 = vmatprep.subr.bf16.mxu0 0
    %2871 = vmatpush1.bf16.msra.mxu0 0
    %2872 = vmatprep.subr.bf16.mxu0 0
    %2873 = vmatpush1.bf16.msra.mxu0 0
    %2874 = vmatprep.subr.bf16.mxu0 0
    %2875 = vmatpush1.bf16.msra.mxu0 0
    %2876 = vmatprep.subr.bf16.mxu0 0
    %2877 = vmatpush1.bf16.msra.mxu0 0
    %2878 = vmatprep.subr.bf16.mxu0 0
    %2879 = vmatpush1.bf16.msra.mxu0 0
    %2880 = vmatprep.subr.bf16.mxu0 0
    %2881 = vmatpush1.bf16.msra.mxu0 0
    %2882 = vmatprep.subr.bf16.mxu0 0
    %2883 = vmatpush1.bf16.msra.mxu0 0
    %2884 = vmatprep.subr.bf16.mxu0 0
    %2885 = vmatpush1.bf16.msra.mxu0 0
    %2886 = vmatprep.mubr.bf16.mxu0 0
    %2887 = vmatmul.mubr.bf16.gmra.mrb[0].mxu0 %v2807
    %v2888 = vpop.f32.mrb[0].mxu0
    %v2889 = vadd.f32 0.0, %v2888
    %v2890 = vpop.f32.mrb[0].mxu0
    %v2891 = vpop.f32.mrb[0].mxu0
    %v2892 = vpop.f32.mrb[0].mxu0
    %2893 = vdwg.mxu0
    %2894 = vmatprep.subr.bf16.mxu0 0
    %2895 = vmatpush1.bf16.msra.mxu0 %v487
    %2896 = vmatprep.subr.bf16.mxu0 0
    %2897 = vmatpush1.bf16.msra.mxu0 %v488
    %2898 = vmatprep.subr.bf16.mxu0 0
    %2899 = vmatpush1.bf16.msra.mxu0 %v489
    %2900 = vmatprep.subr.bf16.mxu0 0
    %2901 = vmatpush1.bf16.msra.mxu0 %v490
    %2902 = vmatprep.subr.bf16.mxu0 0
    %2903 = vmatpush1.bf16.msra.mxu0 %v491
    %2904 = vmatprep.subr.bf16.mxu0 0
    %2905 = vmatpush1.bf16.msra.mxu0 %v492
    %2906 = vmatprep.subr.bf16.mxu0 0
    %2907 = vmatpush1.bf16.msra.mxu0 %v493
    %2908 = vmatprep.subr.bf16.mxu0 0
    %2909 = vmatpush1.bf16.msra.mxu0 %v494
    %2910 = vmatprep.subr.bf16.mxu0 0
    %2911 = vmatpush1.bf16.msra.mxu0 0
    %2912 = vmatprep.subr.bf16.mxu0 0
    %2913 = vmatpush1.bf16.msra.mxu0 0
    %2914 = vmatprep.subr.bf16.mxu0 0
    %2915 = vmatpush1.bf16.msra.mxu0 0
    %2916 = vmatprep.subr.bf16.mxu0 0
    %2917 = vmatpush1.bf16.msra.mxu0 0
    %2918 = vmatprep.subr.bf16.mxu0 0
    %2919 = vmatpush1.bf16.msra.mxu0 0
    %2920 = vmatprep.subr.bf16.mxu0 0
    %2921 = vmatpush1.bf16.msra.mxu0 0
    %2922 = vmatprep.subr.bf16.mxu0 0
    %2923 = vmatpush1.bf16.msra.mxu0 0
    %2924 = vmatprep.subr.bf16.mxu0 0
    %2925 = vmatpush1.bf16.msra.mxu0 0
    %2926 = vmatprep.mubr.bf16.mxu0 0
    %2927 = vmatmul.mubr.bf16.gmra.mrb[0].mxu0 %v2808
    %v2928 = vpop.f32.mrb[0].mxu0
    %v2929 = vadd.f32 0.0, %v2928
    %v2930 = vpop.f32.mrb[0].mxu0
    %v2931 = vpop.f32.mrb[0].mxu0
    %v2932 = vpop.f32.mrb[0].mxu0
    %2933 = vdwg.mxu0
    %2934 = vmatprep.subr.bf16.mxu0 0
    %2935 = vmatpush1.bf16.msra.mxu0 %v495
    %2936 = vmatprep.subr.bf16.mxu0 0
    %2937 = vmatpush1.bf16.msra.mxu0 %v496
    %2938 = vmatprep.subr.bf16.mxu0 0
    %2939 = vmatpush1.bf16.msra.mxu0 %v497
    %2940 = vmatprep.subr.bf16.mxu0 0
    %2941 = vmatpush1.bf16.msra.mxu0 %v498
    %2942 = vmatprep.subr.bf16.mxu0 0
    %2943 = vmatpush1.bf16.msra.mxu0 %v499
    %2944 = vmatprep.subr.bf16.mxu0 0
    %2945 = vmatpush1.bf16.msra.mxu0 %v500
    %2946 = vmatprep.subr.bf16.mxu0 0
    %2947 = vmatpush1.bf16.msra.mxu0 %v501
    %2948 = vmatprep.subr.bf16.mxu0 0
    %2949 = vmatpush1.bf16.msra.mxu0 %v502
    %2950 = vmatprep.subr.bf16.mxu0 0
    %2951 = vmatpush1.bf16.msra.mxu0 0
    %2952 = vmatprep.subr.bf16.mxu0 0
    %2953 = vmatpush1.bf16.msra.mxu0 0
    %2954 = vmatprep.subr.bf16.mxu0 0
    %2955 = vmatpush1.bf16.msra.mxu0 0
    %2956 = vmatprep.subr.bf16.mxu0 0
    %2957 = vmatpush1.bf16.msra.mxu0 0
    %2958 = vmatprep.subr.bf16.mxu0 0
    %2959 = vmatpush1.bf16.msra.mxu0 0
    %2960 = vmatprep.subr.bf16.mxu0 0
    %2961 = vmatpush1.bf16.msra.mxu0 0
    %2962 = vmatprep.subr.bf16.mxu0 0
    %2963 = vmatpush1.bf16.msra.mxu0 0
    %2964 = vmatprep.subr.bf16.mxu0 0
    %2965 = vmatpush1.bf16.msra.mxu0 0
    %2966 = vmatprep.mubr.bf16.mxu0 0
    %2967 = vmatmul.mubr.bf16.gmra.mrb[0].mxu0 %v2809
    %v2968 = vpop.f32.mrb[0].mxu0
    %v2969 = vadd.f32 0.0, %v2968
    %v2970 = vpop.f32.mrb[0].mxu0
    %v2971 = vpop.f32.mrb[0].mxu0
    %v2972 = vpop.f32.mrb[0].mxu0
    %2973 = vdwg.mxu0
    %2974 = vmatprep.subr.bf16.mxu0 0
    %2975 = vmatpush1.bf16.msra.mxu0 %v503
    %2976 = vmatprep.subr.bf16.mxu0 0
    %2977 = vmatpush1.bf16.msra.mxu0 %v504
    %2978 = vmatprep.subr.bf16.mxu0 0
    %2979 = vmatpush1.bf16.msra.mxu0 %v505
    %2980 = vmatprep.subr.bf16.mxu0 0
    %2981 = vmatpush1.bf16.msra.mxu0 %v506
    %2982 = vmatprep.subr.bf16.mxu0 0
    %2983 = vmatpush1.bf16.msra.mxu0 %v507
    %2984 = vmatprep.subr.bf16.mxu0 0
    %2985 = vmatpush1.bf16.msra.mxu0 %v508
    %2986 = vmatprep.subr.bf16.mxu0 0
    %2987 = vmatpush1.bf16.msra.mxu0 %v509
    %2988 = vmatprep.subr.bf16.mxu0 0
    %2989 = vmatpush1.bf16.msra.mxu0 %v510
    %2990 = vmatprep.subr.bf16.mxu0 0
    %2991 = vmatpush1.bf16.msra.mxu0 0
    %2992 = vmatprep.subr.bf16.mxu0 0
    %2993 = vmatpush1.bf16.msra.mxu0 0
    %2994 = vmatprep.subr.bf16.mxu0 0
    %2995 = vmatpush1.bf16.msra.mxu0 0
    %2996 = vmatprep.subr.bf16.mxu0 0
    %2997 = vmatpush1.bf16.msra.mxu0 0
    %2998 = vmatprep.subr.bf16.mxu0 0
    %2999 = vmatpush1.bf16.msra.mxu0 0
    %3000 = vmatprep.subr.bf16.mxu0 0
    %3001 = vmatpush1.bf16.msra.mxu0 0
    %3002 = vmatprep.subr.bf16.mxu0 0
    %3003 = vmatpush1.bf16.msra.mxu0 0
    %3004 = vmatprep.subr.bf16.mxu0 0
    %3005 = vmatpush1.bf16.msra.mxu0 0
    %3006 = vmatprep.mubr.bf16.mxu0 0
    %3007 = vmatmul.mubr.bf16.gmra.mrb[0].mxu0 %v2810
    %v3008 = vpop.f32.mrb[0].mxu0
    %v3009 = vadd.f32 0.0, %v3008
    %v3010 = vpop.f32.mrb[0].mxu0
    %v3011 = vpop.f32.mrb[0].mxu0
    %v3012 = vpop.f32.mrb[0].mxu0
    %3013 = vdwg.mxu0
    %3014 = vmatprep.subr.bf16.mxu0 0
    %3015 = vmatpush1.bf16.msra.mxu0 %v511
    %3016 = vmatprep.subr.bf16.mxu0 0
    %3017 = vmatpush1.bf16.msra.mxu0 %v512
    %3018 = vmatprep.subr.bf16.mxu0 0
    %3019 = vmatpush1.bf16.msra.mxu0 %v513
    %3020 = vmatprep.subr.bf16.mxu0 0
    %3021 = vmatpush1.bf16.msra.mxu0 %v514
    %3022 = vmatprep.subr.bf16.mxu0 0
    %3023 = vmatpush1.bf16.msra.mxu0 %v515
    %3024 = vmatprep.subr.bf16.mxu0 0
    %3025 = vmatpush1.bf16.msra.mxu0 %v516
    %3026 = vmatprep.subr.bf16.mxu0 0
    %3027 = vmatpush1.bf16.msra.mxu0 %v517
    %3028 = vmatprep.subr.bf16.mxu0 0
    %3029 = vmatpush1.bf16.msra.mxu0 %v518
    %3030 = vmatprep.subr.bf16.mxu0 0
    %3031 = vmatpush1.bf16.msra.mxu0 0
    %3032 = vmatprep.subr.bf16.mxu0 0
    %3033 = vmatpush1.bf16.msra.mxu0 0
    %3034 = vmatprep.subr.bf16.mxu0 0
    %3035 = vmatpush1.bf16.msra.mxu0 0
    %3036 = vmatprep.subr.bf16.mxu0 0
    %3037 = vmatpush1.bf16.msra.mxu0 0
    %3038 = vmatprep.subr.bf16.mxu0 0
    %3039 = vmatpush1.bf16.msra.mxu0 0
    %3040 = vmatprep.subr.bf16.mxu0 0
    %3041 = vmatpush1.bf16.msra.mxu0 0
    %3042 = vmatprep.subr.bf16.mxu0 0
    %3043 = vmatpush1.bf16.msra.mxu0 0
    %3044 = vmatprep.subr.bf16.mxu0 0
    %3045 = vmatpush1.bf16.msra.mxu0 0
    %3046 = vmatprep.mubr.bf16.mxu0 0
    %3047 = vmatmul.mubr.bf16.gmra.mrb[0].mxu0 %v2811
    %v3048 = vpop.f32.mrb[0].mxu0
    %v3049 = vadd.f32 0.0, %v3048
    %v3050 = vpop.f32.mrb[0].mxu0
    %v3051 = vpop.f32.mrb[0].mxu0
    %v3052 = vpop.f32.mrb[0].mxu0
    %3053 = vdwg.mxu0
    %3054 = vmatprep.subr.bf16.mxu0 0
    %3055 = vmatpush1.bf16.msra.mxu0 %v519
    %3056 = vmatprep.subr.bf16.mxu0 0
    %3057 = vmatpush1.bf16.msra.mxu0 %v520
    %3058 = vmatprep.subr.bf16.mxu0 0
    %3059 = vmatpush1.bf16.msra.mxu0 %v521
    %3060 = vmatprep.subr.bf16.mxu0 0
    %3061 = vmatpush1.bf16.msra.mxu0 %v522
    %3062 = vmatprep.subr.bf16.mxu0 0
    %3063 = vmatpush1.bf16.msra.mxu0 %v523
    %3064 = vmatprep.subr.bf16.mxu0 0
    %3065 = vmatpush1.bf16.msra.mxu0 %v524
    %3066 = vmatprep.subr.bf16.mxu0 0
    %3067 = vmatpush1.bf16.msra.mxu0 %v525
    %3068 = vmatprep.subr.bf16.mxu0 0
    %3069 = vmatpush1.bf16.msra.mxu0 %v526
    %3070 = vmatprep.subr.bf16.mxu0 0
    %3071 = vmatpush1.bf16.msra.mxu0 0
    %3072 = vmatprep.subr.bf16.mxu0 0
    %3073 = vmatpush1.bf16.msra.mxu0 0
    %3074 = vmatprep.subr.bf16.mxu0 0
    %3075 = vmatpush1.bf16.msra.mxu0 0
    %3076 = vmatprep.subr.bf16.mxu0 0
    %3077 = vmatpush1.bf16.msra.mxu0 0
    %3078 = vmatprep.subr.bf16.mxu0 0
    %3079 = vmatpush1.bf16.msra.mxu0 0
    %3080 = vmatprep.subr.bf16.mxu0 0
    %3081 = vmatpush1.bf16.msra.mxu0 0
    %3082 = vmatprep.subr.bf16.mxu0 0
    %3083 = vmatpush1.bf16.msra.mxu0 0
    %3084 = vmatprep.subr.bf16.mxu0 0
    %3085 = vmatpush1.bf16.msra.mxu0 0
    %3086 = vmatprep.mubr.bf16.mxu0 0
    %3087 = vmatmul.mubr.bf16.gmra.mrb[0].mxu0 %v2812
    %v3088 = vpop.f32.mrb[0].mxu0
    %v3089 = vadd.f32 0.0, %v3088
    %v3090 = vpop.f32.mrb[0].mxu0
    %v3091 = vpop.f32.mrb[0].mxu0
    %v3092 = vpop.f32.mrb[0].mxu0
    %3093 = vdwg.mxu0
    %3094 = vmatprep.subr.bf16.mxu0 0
    %3095 = vmatpush1.bf16.msra.mxu0 %v527
    %3096 = vmatprep.subr.bf16.mxu0 0
    %3097 = vmatpush1.bf16.msra.mxu0 %v528
    %3098 = vmatprep.subr.bf16.mxu0 0
    %3099 = vmatpush1.bf16.msra.mxu0 %v529
    %3100 = vmatprep.subr.bf16.mxu0 0
    %3101 = vmatpush1.bf16.msra.mxu0 %v530
    %3102 = vmatprep.subr.bf16.mxu0 0
    %3103 = vmatpush1.bf16.msra.mxu0 %v531
    %3104 = vmatprep.subr.bf16.mxu0 0
    %3105 = vmatpush1.bf16.msra.mxu0 %v532
    %3106 = vmatprep.subr.bf16.mxu0 0
    %3107 = vmatpush1.bf16.msra.mxu0 %v533
    %3108 = vmatprep.subr.bf16.mxu0 0
    %3109 = vmatpush1.bf16.msra.mxu0 %v534
    %3110 = vmatprep.subr.bf16.mxu0 0
    %3111 = vmatpush1.bf16.msra.mxu0 0
    %3112 = vmatprep.subr.bf16.mxu0 0
    %3113 = vmatpush1.bf16.msra.mxu0 0
    %3114 = vmatprep.subr.bf16.mxu0 0
    %3115 = vmatpush1.bf16.msra.mxu0 0
    %3116 = vmatprep.subr.bf16.mxu0 0
    %3117 = vmatpush1.bf16.msra.mxu0 0
    %3118 = vmatprep.subr.bf16.mxu0 0
    %3119 = vmatpush1.bf16.msra.mxu0 0
    %3120 = vmatprep.subr.bf16.mxu0 0
    %3121 = vmatpush1.bf16.msra.mxu0 0
    %3122 = vmatprep.subr.bf16.mxu0 0
    %3123 = vmatpush1.bf16.msra.mxu0 0
    %3124 = vmatprep.subr.bf16.mxu0 0
    %3125 = vmatpush1.bf16.msra.mxu0 0
    %3126 = vmatprep.mubr.bf16.mxu0 0
    %3127 = vmatmul.mubr.bf16.gmra.mrb[0].mxu0 %v2813
    %v3128 = vpop.f32.mrb[0].mxu0
    %v3129 = vadd.f32 0.0, %v3128
    %v3130 = vpop.f32.mrb[0].mxu0
    %v3131 = vpop.f32.mrb[0].mxu0
    %v3132 = vpop.f32.mrb[0].mxu0
    %3133 = vdwg.mxu0
    %v3142 = vrot.slane %v2889, 7
    %v3143 = vsel %vm2723, %v3142, %v2849
    %v3144 = vrot.slane %v2929, 6
    %v3145 = vsel %vm2725, %v3144, %v3143
    %v3146 = vrot.slane %v2969, 5
    %v3147 = vsel %vm2727, %v3146, %v3145
    %v3148 = vrot.slane %v3009, 4
    %v3149 = vsel %vm2729, %v3148, %v3147
    %v3150 = vrot.slane %v3049, 3
    %v3151 = vsel %vm2731, %v3150, %v3149
    %v3152 = vrot.slane %v3089, 2
    %v3153 = vsel %vm2733, %v3152, %v3151
    %v3154 = vrot.slane %v3129, 1
    %v3155 = vsel %vm2735, %v3154, %v3153
    %3157 = vst [vmem:[#allocation8] sm:$0xff] %v3155
    %3158 = vst [vmem:[#allocation9] sm:$0xff] %v2747
    // Predicated region
    $region34: #{tpu_custom_call.1} parent=1 // pred_check
      _
    $region35: #{tpu_custom_call.1} parent=1 // pred_check_branch
      %3160 = sbr.rel (0) target = $region37
    $region36: #{tpu_custom_call.1} parent=1 // pred_region
      %s3162 = ssub.s32 128, 128
      %3163 = vsyncadd [#allocation4], %s3162
      %s3165 = sshll.u32 [#allocation8], 4
      %s3166 = int_to_ptr.vmem [resolvable:$true] %s3165
      %3168 = dma.vmem_to_hbm [thread:$0]  %s3166, 128, %s5, [#allocation4]
    $region37: #{tpu_custom_call.1} parent=1 // pred_fallthru
      _
    // Predicated region
    $region38: #{tpu_custom_call.1} parent=1 // pred_check
      _
    $region39: #{tpu_custom_call.1} parent=1 // pred_check_branch
      %3170 = sbr.rel (0) target = $region41
    $region40: #{tpu_custom_call.1} parent=1 // pred_region
      %s3172 = ssub.s32 128, 128
      %3173 = vsyncadd [#allocation10], %s3172
      %s3175 = sshll.u32 [#allocation9], 4
      %s3176 = int_to_ptr.vmem [resolvable:$true] %s3175
      %3178 = dma.vmem_to_hbm [thread:$0]  %s3176, 128, %s6, [#allocation10]
    $region41: #{tpu_custom_call.1} parent=1 // pred_fallthru
      _
    // Predicated region
    $region42: #{tpu_custom_call.1} parent=1 // pred_check
      _
    $region43: #{tpu_custom_call.1} parent=1 // pred_check_branch
      %3180 = sbr.rel (0) target = $region45
    $region44: #{tpu_custom_call.1} parent=1 // pred_region
      %3181 = dma.done [#allocation4], 128
    $region45: #{tpu_custom_call.1} parent=1 // pred_fallthru
      _
    // Predicated region
    $region46: #{tpu_custom_call.1} parent=1 // pred_check
      _
    $region47: #{tpu_custom_call.1} parent=1 // pred_check_branch
      %3183 = sbr.rel (0) target = $region49
    $region48: #{tpu_custom_call.1} parent=1 // pred_region
      %3184 = dma.done [#allocation10], 128
    $region49: #{tpu_custom_call.1} parent=1 // pred_fallthru
      _
    %3185 = vsyncpa [#allocation3], 1
    %3186 = vsyncpa [#allocation6], 1
    %3187 = vsyncpa [#allocation4], 1
    %3188 = vsyncpa [#allocation10], 1

</llo_original>
